<compile_context>
chip_gen: v7x
topology: tpu7x:2x2x1
jax: 0.10.0
libtpu: 0.0.40
codegen_flags: <defaults>
</compile_context>

<pallas_src>
import math
from functools import partial

import jax
import jax.numpy as jnp
from jax.experimental import pallas as pl
from jax.experimental.pallas import tpu as pltpu

# Raise the scoped-VMEM cap (defaults: 16 MiB v5e / 32 MiB v6e+), but stay well
# under v7x's 64 MiB physical VMEM.
_VMEM_LIMIT = 48 * 1024 * 1024


def _tile(dim, target, align):
    """Largest `align`-aligned divisor of `dim` that is <= target (or full dim)."""
    if dim <= target:
        return dim
    t = (target // align) * align
    while t >= align:
        if dim % t == 0:
            return t
        t -= align
    return dim


def _gelu_new(y):
    # GPT-2 "gelu_new" (tanh approximation), computed in f32.
    c = math.sqrt(2.0 / math.pi)
    return 0.5 * y * (1.0 + jnp.tanh(c * (y + 0.044715 * (y * y * y))))


# --------------------- fused (LN?) @ W + b (+GELU) (+residual) ---------------------

def _fused_matmul_kernel(x_ref, w_ref, b_ref, *rest, has_ln, has_res,
                         activation, rhs_t, eps):
    pos = 0
    if has_ln:
        g_ref, bln_ref = rest[pos], rest[pos + 1]
        pos += 2
    if has_res:
        res_ref = rest[pos]
        pos += 1
    o_ref = rest[pos]
    acc_ref = rest[pos + 1]

    k = pl.program_id(2)
    nk = pl.num_programs(2)

    @pl.when(k == 0)
    def _():
        acc_ref[...] = jnp.zeros_like(acc_ref)

    x = x_ref[...]
    if has_ln:
        # LayerNorm prologue in f32 over the full feature row (tk == K here).
        xf = x.astype(jnp.float32)
        mu = jnp.mean(xf, axis=-1, keepdims=True)
        var = jnp.mean(jnp.square(xf - mu), axis=-1, keepdims=True)
        xn = (xf - mu) * jax.lax.rsqrt(var + eps)
        xn = xn * g_ref[...].astype(jnp.float32) + bln_ref[...].astype(jnp.float32)
        x = xn.astype(w_ref.dtype)
    else:
        x = x.astype(w_ref.dtype)

    w = w_ref[...]
    if rhs_t:
        # w tile is (tn, tk); contract over its dim 1 (no transposed copy in HBM).
        acc_ref[...] += jax.lax.dot_general(
            x, w, (((1,), (1,)), ((), ())), preferred_element_type=jnp.float32)
    else:
        acc_ref[...] += jnp.dot(x, w, preferred_element_type=jnp.float32)

    @pl.when(k == nk - 1)
    def _():
        y = acc_ref[...] + b_ref[...].astype(jnp.float32)
        if activation == "gelu":
            y = _gelu_new(y)
        if has_res:
            y = y + res_ref[...].astype(jnp.float32)
        o_ref[...] = y.astype(o_ref.dtype)


def fused_matmul(x, w, b, *, gamma=None, beta=None, residual=None,
                 activation=None, rhs_transposed=False, out_dtype=None,
                 tm_max=256, tn_max=512, tk_max=512, eps=1e-5):
    """y = act(LN?(x) @ W + b) + residual?   (GPT-2 Conv1D semantics)."""
    M, K = x.shape
    N = w.shape[0] if rhs_transposed else w.shape[1]
    has_ln = gamma is not None
    has_res = residual is not None

    tm = _tile(M, tm_max, 8)
    tn = _tile(N, tn_max, 128)
    tk = K if has_ln else _tile(K, tk_max, 128)   # LN needs the full feature row
    nm, nn, nk = M // tm, N // tn, K // tk

    w_bf = w.astype(jnp.bfloat16)
    b2 = b.reshape(1, N).astype(jnp.float32)

    in_arrays = [x, w_bf, b2]
    in_specs = [
        pl.BlockSpec((tm, tk), lambda i, j, kk: (i, kk)),
        (pl.BlockSpec((tn, tk), lambda i, j, kk: (j, kk)) if rhs_transposed
         else pl.BlockSpec((tk, tn), lambda i, j, kk: (kk, j))),
        pl.BlockSpec((1, tn), lambda i, j, kk: (0, j)),
    ]
    if has_ln:
        in_arrays += [gamma.reshape(1, K).astype(jnp.float32),
                      beta.reshape(1, K).astype(jnp.float32)]
        in_specs += [pl.BlockSpec((1, K), lambda i, j, kk: (0, 0)),
                     pl.BlockSpec((1, K), lambda i, j, kk: (0, 0))]
    if has_res:
        in_arrays.append(residual)
        in_specs.append(pl.BlockSpec((tm, tn), lambda i, j, kk: (i, j)))

    out_dtype = out_dtype if out_dtype is not None else x.dtype
    kernel = partial(_fused_matmul_kernel, has_ln=has_ln, has_res=has_res,
                     activation=activation, rhs_t=rhs_transposed, eps=eps)
    return pl.pallas_call(
        kernel,
        out_shape=jax.ShapeDtypeStruct((M, N), out_dtype),
        grid=(nm, nn, nk),
        in_specs=in_specs,
        out_specs=pl.BlockSpec((tm, tn), lambda i, j, kk: (i, j)),
        scratch_shapes=[pltpu.VMEM((tm, tn), jnp.float32)],
        compiler_params=pltpu.CompilerParams(
            dimension_semantics=("parallel", "parallel", "arbitrary"),
            vmem_limit_bytes=_VMEM_LIMIT),
    )(*in_arrays)


# ------------------------------ causal self-attention ------------------------------

def _attn_kernel(qkv_q_ref, qkv_kv_ref, o_ref, *, n_head, head_dim, tq, seq, scale):
    # qkv_q_ref : (1, tq, 3D)  rows of the q-tile (q|k|v columns, heads contiguous)
    # qkv_kv_ref: (1, S , 3D)  full-sequence rows (re-used across q-tiles)
    # o_ref     : (1, tq, D)   head-major output, ready for c_proj without transpose
    D = n_head * head_dim
    qi = pl.program_id(1)

    q_rows = qkv_q_ref[0]        # (tq, 3D) bf16
    kv_rows = qkv_kv_ref[0]      # (S , 3D) bf16

    row_pos = qi * tq + jax.lax.broadcasted_iota(jnp.int32, (tq, seq), 0)
    col_pos = jax.lax.broadcasted_iota(jnp.int32, (tq, seq), 1)
    causal = col_pos <= row_pos

    outs = []
    for h in range(n_head):      # static head loop inside the kernel
        q = q_rows[:, h * head_dim:(h + 1) * head_dim]
        k = kv_rows[:, D + h * head_dim: D + (h + 1) * head_dim]
        v = kv_rows[:, 2 * D + h * head_dim: 2 * D + (h + 1) * head_dim]
        s = jax.lax.dot_general(q, k, (((1,), (1,)), ((), ())),
                                preferred_element_type=jnp.float32) * scale  # (tq,S)
        s = jnp.where(causal, s, jnp.float32(-1e30))
        m = jnp.max(s, axis=-1, keepdims=True)
        p = jnp.exp(s - m)
        l = jnp.sum(p, axis=-1, keepdims=True)
        o = jnp.dot(p.astype(v.dtype), v, preferred_element_type=jnp.float32)
        o = o * pl.reciprocal(l, approx=True)
        outs.append(o)
    # Single lane-dense store of all heads.
    o_ref[0] = jnp.concatenate(outs, axis=-1).astype(o_ref.dtype)
    # TODO(synk): add a kv-tile loop with block-causal skipping + multi-head lane
    # grouping (2 heads per 128 lanes at hd=64) to halve attention FLOPs at large S.


def causal_attention(qkv, *, batch, seq, n_head, head_dim, tq_max=256):
    # qkv: (B, S, 3*D) bf16, columns laid out [q heads | k heads | v heads].
    D = n_head * head_dim
    tq = _tile(seq, tq_max, 8)
    nq = seq // tq
    scale = 1.0 / math.sqrt(head_dim)

    q_spec = pl.BlockSpec((1, tq, 3 * D), lambda b, qi: (b, qi, 0))
    kv_spec = pl.BlockSpec((1, seq, 3 * D), lambda b, qi: (b, 0, 0))
    o_spec = pl.BlockSpec((1, tq, D), lambda b, qi: (b, qi, 0))

    return pl.pallas_call(
        partial(_attn_kernel, n_head=n_head, head_dim=head_dim,
                tq=tq, seq=seq, scale=scale),
        out_shape=jax.ShapeDtypeStruct((batch, seq, D), qkv.dtype),
        grid=(batch, nq),
        in_specs=[q_spec, kv_spec],
        out_specs=o_spec,
        compiler_params=pltpu.CompilerParams(
            dimension_semantics=("parallel", "parallel"),
            vmem_limit_bytes=_VMEM_LIMIT),
    )(qkv, qkv)


# ----------------------------------- GPT-2 forward ----------------------------------

def init_params(key, *, vocab, n_pos, n_embd, n_head, n_layer):
    ks = jax.random.split(key, 2 + n_layer)
    std = 0.02
    params = {
        "wte": jax.random.normal(ks[0], (vocab, n_embd), jnp.float32) * std,
        "wpe": jax.random.normal(ks[1], (n_pos, n_embd), jnp.float32) * std,
        "blocks": [],
        "ln_f_g": jnp.ones((n_embd,), jnp.float32),
        "ln_f_b": jnp.zeros((n_embd,), jnp.float32),
    }
    for li in range(n_layer):
        bk = jax.random.split(ks[2 + li], 4)
        blk = {
            "ln1_g": jnp.ones((n_embd,), jnp.float32),
            "ln1_b": jnp.zeros((n_embd,), jnp.float32),
            "c_attn_w": jax.random.normal(bk[0], (n_embd, 3 * n_embd), jnp.float32) * std,
            "c_attn_b": jnp.zeros((3 * n_embd,), jnp.float32),
            "c_proj_w": jax.random.normal(bk[1], (n_embd, n_embd), jnp.float32) * std,
            "c_proj_b": jnp.zeros((n_embd,), jnp.float32),
            "ln2_g": jnp.ones((n_embd,), jnp.float32),
            "ln2_b": jnp.zeros((n_embd,), jnp.float32),
            "c_fc_w": jax.random.normal(bk[2], (n_embd, 4 * n_embd), jnp.float32) * std,
            "c_fc_b": jnp.zeros((4 * n_embd,), jnp.float32),
            "c_proj2_w": jax.random.normal(bk[3], (4 * n_embd, n_embd), jnp.float32) * std,
            "c_proj2_b": jnp.zeros((n_embd,), jnp.float32),
        }
        params["blocks"].append(blk)
    return params


def gpt2_forward(params, input_ids, *, n_head):
    # input_ids: (B, S) int32 -> logits (B, S, vocab) f32
    B, S = input_ids.shape
    D = params["wte"].shape[1]
    hd = D // n_head

    # Embedding lookup (plain-JAX gather glue).
    h = jnp.take(params["wte"], input_ids, axis=0) + params["wpe"][:S][None, :, :]
    x = h.reshape(B * S, D).astype(jnp.float32)     # residual stream kept in f32

    for blk in params["blocks"]:
        # --- attention sub-block: LN1 fused into QKV, residual fused into c_proj ---
        qkv = fused_matmul(x, blk["c_attn_w"], blk["c_attn_b"],
                           gamma=blk["ln1_g"], beta=blk["ln1_b"],
                           out_dtype=jnp.bfloat16)                  # (B*S, 3D)
        attn = causal_attention(qkv.reshape(B, S, 3 * D),
                                batch=B, seq=S, n_head=n_head, head_dim=hd)
        x = fused_matmul(attn.reshape(B * S, D), blk["c_proj_w"], blk["c_proj_b"],
                         residual=x, out_dtype=jnp.float32)

        # --- MLP sub-block: LN2+GELU fused into c_fc, residual fused into c_proj2 ---
        m = fused_matmul(x, blk["c_fc_w"], blk["c_fc_b"],
                         gamma=blk["ln2_g"], beta=blk["ln2_b"],
                         activation="gelu", out_dtype=jnp.bfloat16)
        x = fused_matmul(m, blk["c_proj2_w"], blk["c_proj2_b"],
                         residual=x, out_dtype=jnp.float32)

    # LM head: ln_f fused, tied weight wte (vocab, D) contracted over D directly,
    # vocab padded to a multiple of 128 for lane-dense stores then sliced back.
    vocab, _ = params["wte"].shape
    vp = ((vocab + 127) // 128) * 128
    wte = params["wte"]
    if vp != vocab:
        wte = jnp.pad(wte, ((0, vp - vocab), (0, 0)))
    logits = fused_matmul(x, wte, jnp.zeros((vp,), jnp.float32),
                          gamma=params["ln_f_g"], beta=params["ln_f_b"],
                          rhs_transposed=True, out_dtype=jnp.float32)
    logits = logits[:, :vocab]
    return logits.reshape(B, S, vocab)


# --------------------------- pure-JAX reference (correctness) -----------------------

def _ref_ln(x, g, b, eps=1e-5):
    mu = jnp.mean(x, axis=-1, keepdims=True)
    var = jnp.mean(jnp.square(x - mu), axis=-1, keepdims=True)
    return (x - mu) * jax.lax.rsqrt(var + eps) * g + b


def _ref_matmul(x, w, b, *, gamma=None, beta=None, residual=None, activation=None,
                rhs_transposed=False, out_dtype=jnp.float32):
    xf = x.astype(jnp.float32)
    if gamma is not None:
        xf = _ref_ln(xf, gamma, beta)
    xb = xf.astype(jnp.bfloat16)
    wb = w.astype(jnp.bfloat16)
    if rhs_transposed:
        y = jax.lax.dot_general(xb, wb, (((1,), (1,)), ((), ())),
                                preferred_element_type=jnp.float32)
    else:
        y = jnp.dot(xb, wb, preferred_element_type=jnp.float32)
    y = y + b.astype(jnp.float32)
    if activation == "gelu":
        y = _gelu_new(y)
    if residual is not None:
        y = y + residual.astype(jnp.float32)
    return y.astype(out_dtype)


def gpt2_forward_ref(params, input_ids, *, n_head):
    B, S = input_ids.shape
    D = params["wte"].shape[1]
    hd = D // n_head
    h = jnp.take(params["wte"], input_ids, axis=0) + params["wpe"][:S][None, :, :]
    x = h.reshape(B * S, D).astype(jnp.float32)
    for blk in params["blocks"]:
        qkv = _ref_matmul(x, blk["c_attn_w"], blk["c_attn_b"],
                          gamma=blk["ln1_g"], beta=blk["ln1_b"],
                          out_dtype=jnp.bfloat16)
        qkv = qkv.reshape(B, S, 3, n_head, hd)
        q = qkv[:, :, 0].transpose(0, 2, 1, 3)
        k = qkv[:, :, 1].transpose(0, 2, 1, 3)
        v = qkv[:, :, 2].transpose(0, 2, 1, 3)
        s = jnp.einsum("bhqd,bhkd->bhqk", q, k,
                       preferred_element_type=jnp.float32) / math.sqrt(hd)
        mask = jnp.tril(jnp.ones((S, S), bool))
        s = jnp.where(mask, s, jnp.float32(-1e30))
        p = jax.nn.softmax(s, axis=-1)
        o = jnp.einsum("bhqk,bhkd->bhqd", p.astype(jnp.bfloat16), v,
                       preferred_element_type=jnp.float32)
        attn = o.transpose(0, 2, 1, 3).reshape(B * S, D).astype(jnp.bfloat16)
        x = _ref_matmul(attn, blk["c_proj_w"], blk["c_proj_b"], residual=x)
        m = _ref_matmul(x, blk["c_fc_w"], blk["c_fc_b"], gamma=blk["ln2_g"],
                        beta=blk["ln2_b"], activation="gelu",
                        out_dtype=jnp.bfloat16)
        x = _ref_matmul(m, blk["c_proj2_w"], blk["c_proj2_b"], residual=x)
    vocab = params["wte"].shape[0]
    logits = _ref_matmul(x, params["wte"], jnp.zeros((vocab,), jnp.float32),
                         gamma=params["ln_f_g"], beta=params["ln_f_b"],
                         rhs_transposed=True)
    return logits.reshape(B, S, vocab)


# --------------------------------------- main ---------------------------------------

if __name__ == "__main__":
    VOCAB = 256
    N_POS = 64
    N_EMBD = 32
    N_HEAD = 4
    N_LAYER = 2
    B, S = 2, 8

    key = jax.random.PRNGKey(0)
    pkey, ikey = jax.random.split(key)
    params = init_params(pkey, vocab=VOCAB, n_pos=N_POS, n_embd=N_EMBD,
                         n_head=N_HEAD, n_layer=N_LAYER)
    input_ids = jax.random.randint(ikey, (B, S), 0, VOCAB, dtype=jnp.int32)

    logits = jax.jit(partial(gpt2_forward, n_head=N_HEAD))(params, input_ids)
    jax.block_until_ready(logits)

    assert logits.shape == (B, S, VOCAB)
    assert logits.dtype == jnp.float32
    assert bool(jnp.all(jnp.isfinite(logits)))

    # Loose numerical check against a pure-JAX reference with matching bf16 paths.
    ref = jax.jit(partial(gpt2_forward_ref, n_head=N_HEAD))(params, input_ids)
    jax.block_until_ready(ref)
    max_err = float(jnp.max(jnp.abs(logits - ref)))
    tol = 5e-2 * max(1.0, float(jnp.max(jnp.abs(ref))))
    assert max_err <= tol, f"mismatch vs reference: max_err={max_err} tol={tol}"

    # TODO(synk): generate() (beam search / top-k/top-p sampling + tokenizer
    # decode) is host-side autoregressive control flow, not a kernel hot path.
    print("KERNEL_OK")
</pallas_src>

<mosaic_0001>
module attributes {stable_mosaic.version = 11 : i64} {
  func.func @_attn_kernel(%arg0: i32, %arg1: i32, %arg2: memref<1x8x96xbf16, #tpu.memory_space<vmem>>, %arg3: memref<1x8x96xbf16, #tpu.memory_space<vmem>>, %arg4: memref<1x8x32xbf16, #tpu.memory_space<vmem>>) attributes {dimension_semantics = [#tpu.dimension_semantics<parallel>, #tpu.dimension_semantics<parallel>], iteration_bounds = array<i64: 2, 1>, scalar_prefetch = 0 : i64, scratch_operands = 0 : i64, tpu.core_type = #tpu.core_type<tc>, window_params = [{transform_indices = @transform_0, window_bounds = array<i64: 1, 8, 96>}, {transform_indices = @transform_1, window_bounds = array<i64: 1, 8, 96>}, {transform_indices = @transform_2, window_bounds = array<i64: 1, 8, 32>}]} {
    %c0 = arith.constant 0 : index
    %c0_0 = arith.constant 0 : index
    %c0_1 = arith.constant 0 : index
    %0 = vector.load %arg2[%c0, %c0_0, %c0_1] : memref<1x8x96xbf16, #tpu.memory_space<vmem>>, vector<1x8x96xbf16>
    %1 = vector.shape_cast %0 : vector<1x8x96xbf16> to vector<8x96xbf16>
    %c0_2 = arith.constant 0 : index
    %c0_3 = arith.constant 0 : index
    %c0_4 = arith.constant 0 : index
    %2 = vector.load %arg3[%c0_2, %c0_3, %c0_4] : memref<1x8x96xbf16, #tpu.memory_space<vmem>>, vector<1x8x96xbf16>
    %3 = vector.shape_cast %2 : vector<1x8x96xbf16> to vector<8x96xbf16>
    %c8_i32 = arith.constant 8 : i32
    %4 = arith.muli %arg1, %c8_i32 : i32
    %5 = tpu.iota {dimensions = array<i32: 0>} : vector<8x8xi32>
    %6 = vector.broadcast %4 : i32 to vector<8x8xi32>
    %7 = arith.addi %6, %5 : vector<8x8xi32>
    %8 = tpu.iota {dimensions = array<i32: 1>} : vector<8x8xi32>
    %9 = arith.cmpi sle, %8, %7 : vector<8x8xi32>
    %10 = vector.extract_strided_slice %1 {offsets = [0, 0], sizes = [8, 8], strides = [1, 1]} : vector<8x96xbf16> to vector<8x8xbf16>
    %11 = vector.extract_strided_slice %3 {offsets = [0, 32], sizes = [8, 8], strides = [1, 1]} : vector<8x96xbf16> to vector<8x8xbf16>
    %12 = vector.extract_strided_slice %3 {offsets = [0, 64], sizes = [8, 8], strides = [1, 1]} : vector<8x96xbf16> to vector<8x8xbf16>
    %cst = arith.constant dense<0.000000e+00> : vector<8x8xf32>
    %13 = tpu.matmul %10, %11, %cst {dimension_numbers = #tpu.dot_dimension_numbers<[1], [1], [0], [0], [0, 0, 1, 0], [], []>} : vector<8x8xbf16>, vector<8x8xbf16>, vector<8x8xf32> -> vector<8x8xf32>
    %cst_5 = arith.constant 0.353553385 : f32
    %14 = vector.broadcast %cst_5 : f32 to vector<8x8xf32>
    %15 = arith.mulf %13, %14 : vector<8x8xf32>
    %cst_6 = arith.constant -1.000000e+30 : f32
    %16 = vector.broadcast %cst_6 : f32 to vector<8x8xf32>
    %17 = arith.select %9, %15, %16 : vector<8x8xi1>, vector<8x8xf32>
    %cst_7 = arith.constant dense<0xFF800000> : vector<8xf32>
    %18 = vector.multi_reduction <maximumf>, %17, %cst_7 [1] : vector<8x8xf32> to vector<8xf32>
    %19 = vector.shape_cast %18 : vector<8xf32> to vector<8x1xf32>
    %20 = vector.broadcast %19 : vector<8x1xf32> to vector<8x8xf32>
    %21 = arith.subf %17, %20 : vector<8x8xf32>
    %22 = math.exp %21 : vector<8x8xf32>
    %cst_8 = arith.constant dense<0.000000e+00> : vector<8xf32>
    %23 = vector.multi_reduction <add>, %22, %cst_8 [1] : vector<8x8xf32> to vector<8xf32>
    %24 = vector.shape_cast %23 : vector<8xf32> to vector<8x1xf32>
    %25 = arith.truncf %22 : vector<8x8xf32> to vector<8x8xbf16>
    %cst_9 = arith.constant dense<0.000000e+00> : vector<8x8xf32>
    %26 = tpu.matmul %25, %12, %cst_9 {dimension_numbers = #tpu.dot_dimension_numbers<[1], [0], [0], [1], [0, 0, 1, 1], [], []>} : vector<8x8xbf16>, vector<8x8xbf16>, vector<8x8xf32> -> vector<8x8xf32>
    %27 = tpu.reciprocal %24 {approx = true} : vector<8x1xf32> -> vector<8x1xf32>
    %28 = vector.broadcast %27 : vector<8x1xf32> to vector<8x8xf32>
    %29 = arith.mulf %26, %28 : vector<8x8xf32>
    %30 = vector.extract_strided_slice %1 {offsets = [0, 8], sizes = [8, 8], strides = [1, 1]} : vector<8x96xbf16> to vector<8x8xbf16>
    %31 = vector.extract_strided_slice %3 {offsets = [0, 40], sizes = [8, 8], strides = [1, 1]} : vector<8x96xbf16> to vector<8x8xbf16>
    %32 = vector.extract_strided_slice %3 {offsets = [0, 72], sizes = [8, 8], strides = [1, 1]} : vector<8x96xbf16> to vector<8x8xbf16>
    %cst_10 = arith.constant dense<0.000000e+00> : vector<8x8xf32>
    %33 = tpu.matmul %30, %31, %cst_10 {dimension_numbers = #tpu.dot_dimension_numbers<[1], [1], [0], [0], [0, 0, 1, 0], [], []>} : vector<8x8xbf16>, vector<8x8xbf16>, vector<8x8xf32> -> vector<8x8xf32>
    %cst_11 = arith.constant 0.353553385 : f32
    %34 = vector.broadcast %cst_11 : f32 to vector<8x8xf32>
    %35 = arith.mulf %33, %34 : vector<8x8xf32>
    %cst_12 = arith.constant -1.000000e+30 : f32
    %36 = vector.broadcast %cst_12 : f32 to vector<8x8xf32>
    %37 = arith.select %9, %35, %36 : vector<8x8xi1>, vector<8x8xf32>
    %cst_13 = arith.constant dense<0xFF800000> : vector<8xf32>
    %38 = vector.multi_reduction <maximumf>, %37, %cst_13 [1] : vector<8x8xf32> to vector<8xf32>
    %39 = vector.shape_cast %38 : vector<8xf32> to vector<8x1xf32>
    %40 = vector.broadcast %39 : vector<8x1xf32> to vector<8x8xf32>
    %41 = arith.subf %37, %40 : vector<8x8xf32>
    %42 = math.exp %41 : vector<8x8xf32>
    %cst_14 = arith.constant dense<0.000000e+00> : vector<8xf32>
    %43 = vector.multi_reduction <add>, %42, %cst_14 [1] : vector<8x8xf32> to vector<8xf32>
    %44 = vector.shape_cast %43 : vector<8xf32> to vector<8x1xf32>
    %45 = arith.truncf %42 : vector<8x8xf32> to vector<8x8xbf16>
    %cst_15 = arith.constant dense<0.000000e+00> : vector<8x8xf32>
    %46 = tpu.matmul %45, %32, %cst_15 {dimension_numbers = #tpu.dot_dimension_numbers<[1], [0], [0], [1], [0, 0, 1, 1], [], []>} : vector<8x8xbf16>, vector<8x8xbf16>, vector<8x8xf32> -> vector<8x8xf32>
    %47 = tpu.reciprocal %44 {approx = true} : vector<8x1xf32> -> vector<8x1xf32>
    %48 = vector.broadcast %47 : vector<8x1xf32> to vector<8x8xf32>
    %49 = arith.mulf %46, %48 : vector<8x8xf32>
    %50 = vector.extract_strided_slice %1 {offsets = [0, 16], sizes = [8, 8], strides = [1, 1]} : vector<8x96xbf16> to vector<8x8xbf16>
    %51 = vector.extract_strided_slice %3 {offsets = [0, 48], sizes = [8, 8], strides = [1, 1]} : vector<8x96xbf16> to vector<8x8xbf16>
    %52 = vector.extract_strided_slice %3 {offsets = [0, 80], sizes = [8, 8], strides = [1, 1]} : vector<8x96xbf16> to vector<8x8xbf16>
    %cst_16 = arith.constant dense<0.000000e+00> : vector<8x8xf32>
    %53 = tpu.matmul %50, %51, %cst_16 {dimension_numbers = #tpu.dot_dimension_numbers<[1], [1], [0], [0], [0, 0, 1, 0], [], []>} : vector<8x8xbf16>, vector<8x8xbf16>, vector<8x8xf32> -> vector<8x8xf32>
    %cst_17 = arith.constant 0.353553385 : f32
    %54 = vector.broadcast %cst_17 : f32 to vector<8x8xf32>
    %55 = arith.mulf %53, %54 : vector<8x8xf32>
    %cst_18 = arith.constant -1.000000e+30 : f32
    %56 = vector.broadcast %cst_18 : f32 to vector<8x8xf32>
    %57 = arith.select %9, %55, %56 : vector<8x8xi1>, vector<8x8xf32>
    %cst_19 = arith.constant dense<0xFF800000> : vector<8xf32>
    %58 = vector.multi_reduction <maximumf>, %57, %cst_19 [1] : vector<8x8xf32> to vector<8xf32>
    %59 = vector.shape_cast %58 : vector<8xf32> to vector<8x1xf32>
    %60 = vector.broadcast %59 : vector<8x1xf32> to vector<8x8xf32>
    %61 = arith.subf %57, %60 : vector<8x8xf32>
    %62 = math.exp %61 : vector<8x8xf32>
    %cst_20 = arith.constant dense<0.000000e+00> : vector<8xf32>
    %63 = vector.multi_reduction <add>, %62, %cst_20 [1] : vector<8x8xf32> to vector<8xf32>
    %64 = vector.shape_cast %63 : vector<8xf32> to vector<8x1xf32>
    %65 = arith.truncf %62 : vector<8x8xf32> to vector<8x8xbf16>
    %cst_21 = arith.constant dense<0.000000e+00> : vector<8x8xf32>
    %66 = tpu.matmul %65, %52, %cst_21 {dimension_numbers = #tpu.dot_dimension_numbers<[1], [0], [0], [1], [0, 0, 1, 1], [], []>} : vector<8x8xbf16>, vector<8x8xbf16>, vector<8x8xf32> -> vector<8x8xf32>
    %67 = tpu.reciprocal %64 {approx = true} : vector<8x1xf32> -> vector<8x1xf32>
    %68 = vector.broadcast %67 : vector<8x1xf32> to vector<8x8xf32>
    %69 = arith.mulf %66, %68 : vector<8x8xf32>
    %70 = vector.extract_strided_slice %1 {offsets = [0, 24], sizes = [8, 8], strides = [1, 1]} : vector<8x96xbf16> to vector<8x8xbf16>
    %71 = vector.extract_strided_slice %3 {offsets = [0, 56], sizes = [8, 8], strides = [1, 1]} : vector<8x96xbf16> to vector<8x8xbf16>
    %72 = vector.extract_strided_slice %3 {offsets = [0, 88], sizes = [8, 8], strides = [1, 1]} : vector<8x96xbf16> to vector<8x8xbf16>
    %cst_22 = arith.constant dense<0.000000e+00> : vector<8x8xf32>
    %73 = tpu.matmul %70, %71, %cst_22 {dimension_numbers = #tpu.dot_dimension_numbers<[1], [1], [0], [0], [0, 0, 1, 0], [], []>} : vector<8x8xbf16>, vector<8x8xbf16>, vector<8x8xf32> -> vector<8x8xf32>
    %cst_23 = arith.constant 0.353553385 : f32
    %74 = vector.broadcast %cst_23 : f32 to vector<8x8xf32>
    %75 = arith.mulf %73, %74 : vector<8x8xf32>
    %cst_24 = arith.constant -1.000000e+30 : f32
    %76 = vector.broadcast %cst_24 : f32 to vector<8x8xf32>
    %77 = arith.select %9, %75, %76 : vector<8x8xi1>, vector<8x8xf32>
    %cst_25 = arith.constant dense<0xFF800000> : vector<8xf32>
    %78 = vector.multi_reduction <maximumf>, %77, %cst_25 [1] : vector<8x8xf32> to vector<8xf32>
    %79 = vector.shape_cast %78 : vector<8xf32> to vector<8x1xf32>
    %80 = vector.broadcast %79 : vector<8x1xf32> to vector<8x8xf32>
    %81 = arith.subf %77, %80 : vector<8x8xf32>
    %82 = math.exp %81 : vector<8x8xf32>
    %cst_26 = arith.constant dense<0.000000e+00> : vector<8xf32>
    %83 = vector.multi_reduction <add>, %82, %cst_26 [1] : vector<8x8xf32> to vector<8xf32>
    %84 = vector.shape_cast %83 : vector<8xf32> to vector<8x1xf32>
    %85 = arith.truncf %82 : vector<8x8xf32> to vector<8x8xbf16>
    %cst_27 = arith.constant dense<0.000000e+00> : vector<8x8xf32>
    %86 = tpu.matmul %85, %72, %cst_27 {dimension_numbers = #tpu.dot_dimension_numbers<[1], [0], [0], [1], [0, 0, 1, 1], [], []>} : vector<8x8xbf16>, vector<8x8xbf16>, vector<8x8xf32> -> vector<8x8xf32>
    %87 = tpu.reciprocal %84 {approx = true} : vector<8x1xf32> -> vector<8x1xf32>
    %88 = vector.broadcast %87 : vector<8x1xf32> to vector<8x8xf32>
    %89 = arith.mulf %86, %88 : vector<8x8xf32>
    %90 = tpu.concatenate %29, %49, %69, %89 in 1 : vector<8x8xf32>, vector<8x8xf32>, vector<8x8xf32>, vector<8x8xf32> -> vector<8x32xf32>
    %91 = arith.truncf %90 : vector<8x32xf32> to vector<8x32xbf16>
    %c0_28 = arith.constant 0 : index
    %c0_29 = arith.constant 0 : index
    %c0_30 = arith.constant 0 : index
    %92 = vector.load %arg4[%c0_28, %c0_29, %c0_30] : memref<1x8x32xbf16, #tpu.memory_space<vmem>>, vector<1x8x32xbf16>
    %93 = vector.shape_cast %92 : vector<1x8x32xbf16> to vector<8x32xbf16>
    %94 = vector.shape_cast %91 : vector<8x32xbf16> to vector<1x8x32xbf16>
    tpu.vector_store %arg4[%c0_28, %c0_29, %c0_30], %94 {strides = array<i32>} : memref<1x8x32xbf16, #tpu.memory_space<vmem>>, vector<1x8x32xbf16>,
    return
  }
  func.func @transform_0(%arg0: i32, %arg1: i32) -> (i32, i32, i32) {
    %c0_i32 = arith.constant 0 : i32
    %c0_i32_0 = arith.constant 0 : i32
    return %arg0, %arg1, %c0_i32 : i32, i32, i32
  }
  func.func @transform_1(%arg0: i32, %arg1: i32) -> (i32, i32, i32) {
    %c0_i32 = arith.constant 0 : i32
    %c0_i32_0 = arith.constant 0 : i32
    %c0_i32_1 = arith.constant 0 : i32
    return %arg0, %c0_i32, %c0_i32_0 : i32, i32, i32
  }
  func.func @transform_2(%arg0: i32, %arg1: i32) -> (i32, i32, i32) {
    %c0_i32 = arith.constant 0 : i32
    %c0_i32_0 = arith.constant 0 : i32
    return %arg0, %arg1, %c0_i32 : i32, i32, i32
  }
}

module attributes {stable_mosaic.version = 11 : i64} {
  func.func @_fused_matmul_kernel(%arg0: i32, %arg1: i32, %arg2: i32, %arg3: memref<16x32xf32, #tpu.memory_space<vmem>>, %arg4: memref<32x96xbf16, #tpu.memory_space<vmem>>, %arg5: memref<1x96xf32, #tpu.memory_space<vmem>>, %arg6: memref<1x32xf32, #tpu.memory_space<vmem>>, %arg7: memref<1x32xf32, #tpu.memory_space<vmem>>, %arg8: memref<16x96xbf16, #tpu.memory_space<vmem>>, %arg9: memref<16x96xf32, #tpu.memory_space<vmem>>) attributes {dimension_semantics = [#tpu.dimension_semantics<parallel>, #tpu.dimension_semantics<parallel>, #tpu.dimension_semantics<arbitrary>], iteration_bounds = array<i64: 1, 1, 1>, scalar_prefetch = 0 : i64, scratch_operands = 1 : i64, tpu.core_type = #tpu.core_type<tc>, window_params = [{transform_indices = @transform_0, window_bounds = array<i64: 16, 32>}, {transform_indices = @transform_1, window_bounds = array<i64: 32, 96>}, {transform_indices = @transform_2, window_bounds = array<i64: 1, 96>}, {pipeline_mode = #tpu.pipeline_mode<synchronous>, transform_indices = @transform_3, window_bounds = array<i64: 1, 32>}, {pipeline_mode = #tpu.pipeline_mode<synchronous>, transform_indices = @transform_4, window_bounds = array<i64: 1, 32>}, {transform_indices = @transform_5, window_bounds = array<i64: 16, 96>}]} {
    %c0_i32 = arith.constant 0 : i32
    %0 = arith.cmpi eq, %arg2, %c0_i32 : i32
    %1 = arith.extui %0 : i1 to i32
    %c0_i32_0 = arith.constant 0 : i32
    %2 = arith.cmpi ne, %1, %c0_i32_0 : i32
    scf.if %2 {
      %cst_19 = arith.constant 0.000000e+00 : f32
      %37 = vector.broadcast %cst_19 : f32 to vector<16x96xf32>
      %c0_20 = arith.constant 0 : index
      %c0_21 = arith.constant 0 : index
      %38 = vector.load %arg9[%c0_20, %c0_21] : memref<16x96xf32, #tpu.memory_space<vmem>>, vector<16x96xf32>
      tpu.vector_store %arg9[%c0_20, %c0_21], %37 {strides = array<i32>} : memref<16x96xf32, #tpu.memory_space<vmem>>, vector<16x96xf32>,
    } else {
    }
    %c0 = arith.constant 0 : index
    %c0_1 = arith.constant 0 : index
    %3 = vector.load %arg3[%c0, %c0_1] : memref<16x32xf32, #tpu.memory_space<vmem>>, vector<16x32xf32>
    %cst = arith.constant dense<0.000000e+00> : vector<16xf32>
    %4 = vector.multi_reduction <add>, %3, %cst [1] : vector<16x32xf32> to vector<16xf32>
    %5 = vector.shape_cast %4 : vector<16xf32> to vector<16x1xf32>
    %cst_2 = arith.constant 3.200000e+01 : f32
    %6 = vector.broadcast %cst_2 : f32 to vector<16x1xf32>
    %7 = arith.divf %5, %6 : vector<16x1xf32>
    %8 = vector.broadcast %7 : vector<16x1xf32> to vector<16x32xf32>
    %9 = arith.subf %3, %8 : vector<16x32xf32>
    %10 = arith.mulf %9, %9 : vector<16x32xf32>
    %cst_3 = arith.constant dense<0.000000e+00> : vector<16xf32>
    %11 = vector.multi_reduction <add>, %10, %cst_3 [1] : vector<16x32xf32> to vector<16xf32>
    %12 = vector.shape_cast %11 : vector<16xf32> to vector<16x1xf32>
    %cst_4 = arith.constant 3.200000e+01 : f32
    %13 = vector.broadcast %cst_4 : f32 to vector<16x1xf32>
    %14 = arith.divf %12, %13 : vector<16x1xf32>
    %15 = vector.broadcast %7 : vector<16x1xf32> to vector<16x32xf32>
    %16 = arith.subf %3, %15 : vector<16x32xf32>
    %cst_5 = arith.constant 9.99999974E-6 : f32
    %17 = vector.broadcast %cst_5 : f32 to vector<16x1xf32>
    %18 = arith.addf %14, %17 : vector<16x1xf32>
    %19 = math.rsqrt %18 : vector<16x1xf32>
    %20 = vector.broadcast %19 : vector<16x1xf32> to vector<16x32xf32>
    %21 = arith.mulf %16, %20 : vector<16x32xf32>
    %c0_6 = arith.constant 0 : index
    %c0_7 = arith.constant 0 : index
    %22 = vector.load %arg6[%c0_6, %c0_7] : memref<1x32xf32, #tpu.memory_space<vmem>>, vector<1x32xf32>
    %23 = vector.broadcast %22 : vector<1x32xf32> to vector<16x32xf32>
    %24 = arith.mulf %21, %23 : vector<16x32xf32>
    %c0_8 = arith.constant 0 : index
    %c0_9 = arith.constant 0 : index
    %25 = vector.load %arg7[%c0_8, %c0_9] : memref<1x32xf32, #tpu.memory_space<vmem>>, vector<1x32xf32>
    %26 = vector.broadcast %25 : vector<1x32xf32> to vector<16x32xf32>
    %27 = arith.addf %24, %26 : vector<16x32xf32>
    %28 = arith.truncf %27 : vector<16x32xf32> to vector<16x32xbf16>
    %c0_10 = arith.constant 0 : index
    %c0_11 = arith.constant 0 : index
    %29 = vector.load %arg4[%c0_10, %c0_11] : memref<32x96xbf16, #tpu.memory_space<vmem>>, vector<32x96xbf16>
    %c0_12 = arith.constant 0 : index
    %c0_13 = arith.constant 0 : index
    %30 = vector.load %arg9[%c0_12, %c0_13] : memref<16x96xf32, #tpu.memory_space<vmem>>, vector<16x96xf32>
    %cst_14 = arith.constant dense<0.000000e+00> : vector<16x96xf32>
    %31 = tpu.matmul %28, %29, %cst_14 {dimension_numbers = #tpu.dot_dimension_numbers<[1], [0], [0], [1], [0, 0, 1, 1], [], []>} : vector<16x32xbf16>, vector<32x96xbf16>, vector<16x96xf32> -> vector<16x96xf32>
    %32 = arith.addf %30, %31 : vector<16x96xf32>
    %c0_15 = arith.constant 0 : index
    %c0_16 = arith.constant 0 : index
    %33 = vector.load %arg9[%c0_15, %c0_16] : memref<16x96xf32, #tpu.memory_space<vmem>>, vector<16x96xf32>
    tpu.vector_store %arg9[%c0_15, %c0_16], %32 {strides = array<i32>} : memref<16x96xf32, #tpu.memory_space<vmem>>, vector<16x96xf32>,
    %c0_i32_17 = arith.constant 0 : i32
    %34 = arith.cmpi eq, %arg2, %c0_i32_17 : i32
    %35 = arith.extui %34 : i1 to i32
    %c0_i32_18 = arith.constant 0 : i32
    %36 = arith.cmpi ne, %35, %c0_i32_18 : i32
    scf.if %36 {
      %c0_19 = arith.constant 0 : index
      %c0_20 = arith.constant 0 : index
      %37 = vector.load %arg9[%c0_19, %c0_20] : memref<16x96xf32, #tpu.memory_space<vmem>>, vector<16x96xf32>
      %c0_21 = arith.constant 0 : index
      %c0_22 = arith.constant 0 : index
      %38 = vector.load %arg5[%c0_21, %c0_22] : memref<1x96xf32, #tpu.memory_space<vmem>>, vector<1x96xf32>
      %39 = vector.broadcast %38 : vector<1x96xf32> to vector<16x96xf32>
      %40 = arith.addf %37, %39 : vector<16x96xf32>
      %41 = arith.truncf %40 : vector<16x96xf32> to vector<16x96xbf16>
      %c0_23 = arith.constant 0 : index
      %c0_24 = arith.constant 0 : index
      %42 = vector.load %arg8[%c0_23, %c0_24] : memref<16x96xbf16, #tpu.memory_space<vmem>>, vector<16x96xbf16>
      tpu.vector_store %arg8[%c0_23, %c0_24], %41 {strides = array<i32>} : memref<16x96xbf16, #tpu.memory_space<vmem>>, vector<16x96xbf16>,
    } else {
    }
    return
  }
  func.func @transform_0(%arg0: i32, %arg1: i32, %arg2: i32) -> (i32, i32) {
    %c0_i32 = arith.constant 0 : i32
    return %arg0, %arg2 : i32, i32
  }
  func.func @transform_1(%arg0: i32, %arg1: i32, %arg2: i32) -> (i32, i32) {
    %c0_i32 = arith.constant 0 : i32
    return %arg2, %arg1 : i32, i32
  }
  func.func @transform_2(%arg0: i32, %arg1: i32, %arg2: i32) -> (i32, i32) {
    %c0_i32 = arith.constant 0 : i32
    %c0_i32_0 = arith.constant 0 : i32
    return %c0_i32, %arg1 : i32, i32
  }
  func.func @transform_3(%arg0: i32, %arg1: i32, %arg2: i32) -> (i32, i32) {
    %c0_i32 = arith.constant 0 : i32
    %c0_i32_0 = arith.constant 0 : i32
    %c0_i32_1 = arith.constant 0 : i32
    return %c0_i32, %c0_i32_0 : i32, i32
  }
  func.func @transform_4(%arg0: i32, %arg1: i32, %arg2: i32) -> (i32, i32) {
    %c0_i32 = arith.constant 0 : i32
    %c0_i32_0 = arith.constant 0 : i32
    %c0_i32_1 = arith.constant 0 : i32
    return %c0_i32, %c0_i32_0 : i32, i32
  }
  func.func @transform_5(%arg0: i32, %arg1: i32, %arg2: i32) -> (i32, i32) {
    %c0_i32 = arith.constant 0 : i32
    return %arg0, %arg1 : i32, i32
  }
}

module attributes {stable_mosaic.version = 11 : i64} {
  func.func @_fused_matmul_kernel(%arg0: i32, %arg1: i32, %arg2: i32, %arg3: memref<16x32xbf16, #tpu.memory_space<vmem>>, %arg4: memref<32x32xbf16, #tpu.memory_space<vmem>>, %arg5: memref<1x32xf32, #tpu.memory_space<vmem>>, %arg6: memref<16x32xf32, #tpu.memory_space<vmem>>, %arg7: memref<16x32xf32, #tpu.memory_space<vmem>>, %arg8: memref<16x32xf32, #tpu.memory_space<vmem>>) attributes {dimension_semantics = [#tpu.dimension_semantics<parallel>, #tpu.dimension_semantics<parallel>, #tpu.dimension_semantics<arbitrary>], iteration_bounds = array<i64: 1, 1, 1>, scalar_prefetch = 0 : i64, scratch_operands = 1 : i64, tpu.core_type = #tpu.core_type<tc>, window_params = [{transform_indices = @transform_0, window_bounds = array<i64: 16, 32>}, {transform_indices = @transform_1, window_bounds = array<i64: 32, 32>}, {transform_indices = @transform_2, window_bounds = array<i64: 1, 32>}, {transform_indices = @transform_3, window_bounds = array<i64: 16, 32>}, {transform_indices = @transform_4, window_bounds = array<i64: 16, 32>}]} {
    %c0_i32 = arith.constant 0 : i32
    %0 = arith.cmpi eq, %arg2, %c0_i32 : i32
    %1 = arith.extui %0 : i1 to i32
    %c0_i32_0 = arith.constant 0 : i32
    %2 = arith.cmpi ne, %1, %c0_i32_0 : i32
    scf.if %2 {
      %cst_10 = arith.constant 0.000000e+00 : f32
      %12 = vector.broadcast %cst_10 : f32 to vector<16x32xf32>
      %c0_11 = arith.constant 0 : index
      %c0_12 = arith.constant 0 : index
      %13 = vector.load %arg8[%c0_11, %c0_12] : memref<16x32xf32, #tpu.memory_space<vmem>>, vector<16x32xf32>
      tpu.vector_store %arg8[%c0_11, %c0_12], %12 {strides = array<i32>} : memref<16x32xf32, #tpu.memory_space<vmem>>, vector<16x32xf32>,
    } else {
    }
    %c0 = arith.constant 0 : index
    %c0_1 = arith.constant 0 : index
    %3 = vector.load %arg3[%c0, %c0_1] : memref<16x32xbf16, #tpu.memory_space<vmem>>, vector<16x32xbf16>
    %c0_2 = arith.constant 0 : index
    %c0_3 = arith.constant 0 : index
    %4 = vector.load %arg4[%c0_2, %c0_3] : memref<32x32xbf16, #tpu.memory_space<vmem>>, vector<32x32xbf16>
    %c0_4 = arith.constant 0 : index
    %c0_5 = arith.constant 0 : index
    %5 = vector.load %arg8[%c0_4, %c0_5] : memref<16x32xf32, #tpu.memory_space<vmem>>, vector<16x32xf32>
    %cst = arith.constant dense<0.000000e+00> : vector<16x32xf32>
    %6 = tpu.matmul %3, %4, %cst {dimension_numbers = #tpu.dot_dimension_numbers<[1], [0], [0], [1], [0, 0, 1, 1], [], []>} : vector<16x32xbf16>, vector<32x32xbf16>, vector<16x32xf32> -> vector<16x32xf32>
    %7 = arith.addf %5, %6 : vector<16x32xf32>
    %c0_6 = arith.constant 0 : index
    %c0_7 = arith.constant 0 : index
    %8 = vector.load %arg8[%c0_6, %c0_7] : memref<16x32xf32, #tpu.memory_space<vmem>>, vector<16x32xf32>
    tpu.vector_store %arg8[%c0_6, %c0_7], %7 {strides = array<i32>} : memref<16x32xf32, #tpu.memory_space<vmem>>, vector<16x32xf32>,
    %c0_i32_8 = arith.constant 0 : i32
    %9 = arith.cmpi eq, %arg2, %c0_i32_8 : i32
    %10 = arith.extui %9 : i1 to i32
    %c0_i32_9 = arith.constant 0 : i32
    %11 = arith.cmpi ne, %10, %c0_i32_9 : i32
    scf.if %11 {
      %c0_10 = arith.constant 0 : index
      %c0_11 = arith.constant 0 : index
      %12 = vector.load %arg8[%c0_10, %c0_11] : memref<16x32xf32, #tpu.memory_space<vmem>>, vector<16x32xf32>
      %c0_12 = arith.constant 0 : index
      %c0_13 = arith.constant 0 : index
      %13 = vector.load %arg5[%c0_12, %c0_13] : memref<1x32xf32, #tpu.memory_space<vmem>>, vector<1x32xf32>
      %14 = vector.broadcast %13 : vector<1x32xf32> to vector<16x32xf32>
      %15 = arith.addf %12, %14 : vector<16x32xf32>
      %c0_14 = arith.constant 0 : index
      %c0_15 = arith.constant 0 : index
      %16 = vector.load %arg6[%c0_14, %c0_15] : memref<16x32xf32, #tpu.memory_space<vmem>>, vector<16x32xf32>
      %17 = arith.addf %15, %16 : vector<16x32xf32>
      %c0_16 = arith.constant 0 : index
      %c0_17 = arith.constant 0 : index
      %18 = vector.load %arg7[%c0_16, %c0_17] : memref<16x32xf32, #tpu.memory_space<vmem>>, vector<16x32xf32>
      tpu.vector_store %arg7[%c0_16, %c0_17], %17 {strides = array<i32>} : memref<16x32xf32, #tpu.memory_space<vmem>>, vector<16x32xf32>,
    } else {
    }
    return
  }
  func.func @transform_0(%arg0: i32, %arg1: i32, %arg2: i32) -> (i32, i32) {
    %c0_i32 = arith.constant 0 : i32
    return %arg0, %arg2 : i32, i32
  }
  func.func @transform_1(%arg0: i32, %arg1: i32, %arg2: i32) -> (i32, i32) {
    %c0_i32 = arith.constant 0 : i32
    return %arg2, %arg1 : i32, i32
  }
  func.func @transform_2(%arg0: i32, %arg1: i32, %arg2: i32) -> (i32, i32) {
    %c0_i32 = arith.constant 0 : i32
    %c0_i32_0 = arith.constant 0 : i32
    return %c0_i32, %arg1 : i32, i32
  }
  func.func @transform_3(%arg0: i32, %arg1: i32, %arg2: i32) -> (i32, i32) {
    %c0_i32 = arith.constant 0 : i32
    return %arg0, %arg1 : i32, i32
  }
  func.func @transform_4(%arg0: i32, %arg1: i32, %arg2: i32) -> (i32, i32) {
    %c0_i32 = arith.constant 0 : i32
    return %arg0, %arg1 : i32, i32
  }
}

module attributes {stable_mosaic.version = 11 : i64} {
  func.func @_fused_matmul_kernel(%arg0: i32, %arg1: i32, %arg2: i32, %arg3: memref<16x32xf32, #tpu.memory_space<vmem>>, %arg4: memref<32x128xbf16, #tpu.memory_space<vmem>>, %arg5: memref<1x128xf32, #tpu.memory_space<vmem>>, %arg6: memref<1x32xf32, #tpu.memory_space<vmem>>, %arg7: memref<1x32xf32, #tpu.memory_space<vmem>>, %arg8: memref<16x128xbf16, #tpu.memory_space<vmem>>, %arg9: memref<16x128xf32, #tpu.memory_space<vmem>>) attributes {dimension_semantics = [#tpu.dimension_semantics<parallel>, #tpu.dimension_semantics<parallel>, #tpu.dimension_semantics<arbitrary>], iteration_bounds = array<i64: 1, 1, 1>, scalar_prefetch = 0 : i64, scratch_operands = 1 : i64, tpu.core_type = #tpu.core_type<tc>, window_params = [{transform_indices = @transform_0, window_bounds = array<i64: 16, 32>}, {transform_indices = @transform_1, window_bounds = array<i64: 32, 128>}, {transform_indices = @transform_2, window_bounds = array<i64: 1, 128>}, {pipeline_mode = #tpu.pipeline_mode<synchronous>, transform_indices = @transform_3, window_bounds = array<i64: 1, 32>}, {pipeline_mode = #tpu.pipeline_mode<synchronous>, transform_indices = @transform_4, window_bounds = array<i64: 1, 32>}, {transform_indices = @transform_5, window_bounds = array<i64: 16, 128>}]} {
    %c0_i32 = arith.constant 0 : i32
    %0 = arith.cmpi eq, %arg2, %c0_i32 : i32
    %1 = arith.extui %0 : i1 to i32
    %c0_i32_0 = arith.constant 0 : i32
    %2 = arith.cmpi ne, %1, %c0_i32_0 : i32
    scf.if %2 {
      %cst_19 = arith.constant 0.000000e+00 : f32
      %37 = vector.broadcast %cst_19 : f32 to vector<16x128xf32>
      %c0_20 = arith.constant 0 : index
      %c0_21 = arith.constant 0 : index
      %38 = vector.load %arg9[%c0_20, %c0_21] : memref<16x128xf32, #tpu.memory_space<vmem>>, vector<16x128xf32>
      tpu.vector_store %arg9[%c0_20, %c0_21], %37 {strides = array<i32>} : memref<16x128xf32, #tpu.memory_space<vmem>>, vector<16x128xf32>,
    } else {
    }
    %c0 = arith.constant 0 : index
    %c0_1 = arith.constant 0 : index
    %3 = vector.load %arg3[%c0, %c0_1] : memref<16x32xf32, #tpu.memory_space<vmem>>, vector<16x32xf32>
    %cst = arith.constant dense<0.000000e+00> : vector<16xf32>
    %4 = vector.multi_reduction <add>, %3, %cst [1] : vector<16x32xf32> to vector<16xf32>
    %5 = vector.shape_cast %4 : vector<16xf32> to vector<16x1xf32>
    %cst_2 = arith.constant 3.200000e+01 : f32
    %6 = vector.broadcast %cst_2 : f32 to vector<16x1xf32>
    %7 = arith.divf %5, %6 : vector<16x1xf32>
    %8 = vector.broadcast %7 : vector<16x1xf32> to vector<16x32xf32>
    %9 = arith.subf %3, %8 : vector<16x32xf32>
    %10 = arith.mulf %9, %9 : vector<16x32xf32>
    %cst_3 = arith.constant dense<0.000000e+00> : vector<16xf32>
    %11 = vector.multi_reduction <add>, %10, %cst_3 [1] : vector<16x32xf32> to vector<16xf32>
    %12 = vector.shape_cast %11 : vector<16xf32> to vector<16x1xf32>
    %cst_4 = arith.constant 3.200000e+01 : f32
    %13 = vector.broadcast %cst_4 : f32 to vector<16x1xf32>
    %14 = arith.divf %12, %13 : vector<16x1xf32>
    %15 = vector.broadcast %7 : vector<16x1xf32> to vector<16x32xf32>
    %16 = arith.subf %3, %15 : vector<16x32xf32>
    %cst_5 = arith.constant 9.99999974E-6 : f32
    %17 = vector.broadcast %cst_5 : f32 to vector<16x1xf32>
    %18 = arith.addf %14, %17 : vector<16x1xf32>
    %19 = math.rsqrt %18 : vector<16x1xf32>
    %20 = vector.broadcast %19 : vector<16x1xf32> to vector<16x32xf32>
    %21 = arith.mulf %16, %20 : vector<16x32xf32>
    %c0_6 = arith.constant 0 : index
    %c0_7 = arith.constant 0 : index
    %22 = vector.load %arg6[%c0_6, %c0_7] : memref<1x32xf32, #tpu.memory_space<vmem>>, vector<1x32xf32>
    %23 = vector.broadcast %22 : vector<1x32xf32> to vector<16x32xf32>
    %24 = arith.mulf %21, %23 : vector<16x32xf32>
    %c0_8 = arith.constant 0 : index
    %c0_9 = arith.constant 0 : index
    %25 = vector.load %arg7[%c0_8, %c0_9] : memref<1x32xf32, #tpu.memory_space<vmem>>, vector<1x32xf32>
    %26 = vector.broadcast %25 : vector<1x32xf32> to vector<16x32xf32>
    %27 = arith.addf %24, %26 : vector<16x32xf32>
    %28 = arith.truncf %27 : vector<16x32xf32> to vector<16x32xbf16>
    %c0_10 = arith.constant 0 : index
    %c0_11 = arith.constant 0 : index
    %29 = vector.load %arg4[%c0_10, %c0_11] : memref<32x128xbf16, #tpu.memory_space<vmem>>, vector<32x128xbf16>
    %c0_12 = arith.constant 0 : index
    %c0_13 = arith.constant 0 : index
    %30 = vector.load %arg9[%c0_12, %c0_13] : memref<16x128xf32, #tpu.memory_space<vmem>>, vector<16x128xf32>
    %cst_14 = arith.constant dense<0.000000e+00> : vector<16x128xf32>
    %31 = tpu.matmul %28, %29, %cst_14 {dimension_numbers = #tpu.dot_dimension_numbers<[1], [0], [0], [1], [0, 0, 1, 1], [], []>} : vector<16x32xbf16>, vector<32x128xbf16>, vector<16x128xf32> -> vector<16x128xf32>
    %32 = arith.addf %30, %31 : vector<16x128xf32>
    %c0_15 = arith.constant 0 : index
    %c0_16 = arith.constant 0 : index
    %33 = vector.load %arg9[%c0_15, %c0_16] : memref<16x128xf32, #tpu.memory_space<vmem>>, vector<16x128xf32>
    tpu.vector_store %arg9[%c0_15, %c0_16], %32 {strides = array<i32>} : memref<16x128xf32, #tpu.memory_space<vmem>>, vector<16x128xf32>,
    %c0_i32_17 = arith.constant 0 : i32
    %34 = arith.cmpi eq, %arg2, %c0_i32_17 : i32
    %35 = arith.extui %34 : i1 to i32
    %c0_i32_18 = arith.constant 0 : i32
    %36 = arith.cmpi ne, %35, %c0_i32_18 : i32
    scf.if %36 {
      %c0_19 = arith.constant 0 : index
      %c0_20 = arith.constant 0 : index
      %37 = vector.load %arg9[%c0_19, %c0_20] : memref<16x128xf32, #tpu.memory_space<vmem>>, vector<16x128xf32>
      %c0_21 = arith.constant 0 : index
      %c0_22 = arith.constant 0 : index
      %38 = vector.load %arg5[%c0_21, %c0_22] : memref<1x128xf32, #tpu.memory_space<vmem>>, vector<1x128xf32>
      %39 = vector.broadcast %38 : vector<1x128xf32> to vector<16x128xf32>
      %40 = arith.addf %37, %39 : vector<16x128xf32>
      %cst_23 = arith.constant 5.000000e-01 : f32
      %41 = vector.broadcast %cst_23 : f32 to vector<16x128xf32>
      %42 = arith.mulf %41, %40 : vector<16x128xf32>
      %43 = arith.mulf %40, %40 : vector<16x128xf32>
      %44 = arith.mulf %43, %40 : vector<16x128xf32>
      %cst_24 = arith.constant 4.471500e-02 : f32
      %45 = vector.broadcast %cst_24 : f32 to vector<16x128xf32>
      %46 = arith.mulf %45, %44 : vector<16x128xf32>
      %47 = arith.addf %40, %46 : vector<16x128xf32>
      %cst_25 = arith.constant 0.797884583 : f32
      %48 = vector.broadcast %cst_25 : f32 to vector<16x128xf32>
      %49 = arith.mulf %48, %47 : vector<16x128xf32>
      %50 = math.tanh %49 : vector<16x128xf32>
      %cst_26 = arith.constant 1.000000e+00 : f32
      %51 = vector.broadcast %cst_26 : f32 to vector<16x128xf32>
      %52 = arith.addf %51, %50 : vector<16x128xf32>
      %53 = arith.mulf %42, %52 : vector<16x128xf32>
      %54 = arith.truncf %53 : vector<16x128xf32> to vector<16x128xbf16>
      %c0_27 = arith.constant 0 : index
      %c0_28 = arith.constant 0 : index
      %55 = vector.load %arg8[%c0_27, %c0_28] : memref<16x128xbf16, #tpu.memory_space<vmem>>, vector<16x128xbf16>
      tpu.vector_store %arg8[%c0_27, %c0_28], %54 {strides = array<i32>} : memref<16x128xbf16, #tpu.memory_space<vmem>>, vector<16x128xbf16>,
    } else {
    }
    return
  }
  func.func @transform_0(%arg0: i32, %arg1: i32, %arg2: i32) -> (i32, i32) {
    %c0_i32 = arith.constant 0 : i32
    return %arg0, %arg2 : i32, i32
  }
  func.func @transform_1(%arg0: i32, %arg1: i32, %arg2: i32) -> (i32, i32) {
    %c0_i32 = arith.constant 0 : i32
    return %arg2, %arg1 : i32, i32
  }
  func.func @transform_2(%arg0: i32, %arg1: i32, %arg2: i32) -> (i32, i32) {
    %c0_i32 = arith.constant 0 : i32
    %c0_i32_0 = arith.constant 0 : i32
    return %c0_i32, %arg1 : i32, i32
  }
  func.func @transform_3(%arg0: i32, %arg1: i32, %arg2: i32) -> (i32, i32) {
    %c0_i32 = arith.constant 0 : i32
    %c0_i32_0 = arith.constant 0 : i32
    %c0_i32_1 = arith.constant 0 : i32
    return %c0_i32, %c0_i32_0 : i32, i32
  }
  func.func @transform_4(%arg0: i32, %arg1: i32, %arg2: i32) -> (i32, i32) {
    %c0_i32 = arith.constant 0 : i32
    %c0_i32_0 = arith.constant 0 : i32
    %c0_i32_1 = arith.constant 0 : i32
    return %c0_i32, %c0_i32_0 : i32, i32
  }
  func.func @transform_5(%arg0: i32, %arg1: i32, %arg2: i32) -> (i32, i32) {
    %c0_i32 = arith.constant 0 : i32
    return %arg0, %arg1 : i32, i32
  }
}

module attributes {stable_mosaic.version = 11 : i64} {
  func.func @_fused_matmul_kernel(%arg0: i32, %arg1: i32, %arg2: i32, %arg3: memref<16x128xbf16, #tpu.memory_space<vmem>>, %arg4: memref<128x32xbf16, #tpu.memory_space<vmem>>, %arg5: memref<1x32xf32, #tpu.memory_space<vmem>>, %arg6: memref<16x32xf32, #tpu.memory_space<vmem>>, %arg7: memref<16x32xf32, #tpu.memory_space<vmem>>, %arg8: memref<16x32xf32, #tpu.memory_space<vmem>>) attributes {dimension_semantics = [#tpu.dimension_semantics<parallel>, #tpu.dimension_semantics<parallel>, #tpu.dimension_semantics<arbitrary>], iteration_bounds = array<i64: 1, 1, 1>, scalar_prefetch = 0 : i64, scratch_operands = 1 : i64, tpu.core_type = #tpu.core_type<tc>, window_params = [{transform_indices = @transform_0, window_bounds = array<i64: 16, 128>}, {transform_indices = @transform_1, window_bounds = array<i64: 128, 32>}, {transform_indices = @transform_2, window_bounds = array<i64: 1, 32>}, {transform_indices = @transform_3, window_bounds = array<i64: 16, 32>}, {transform_indices = @transform_4, window_bounds = array<i64: 16, 32>}]} {
    %c0_i32 = arith.constant 0 : i32
    %0 = arith.cmpi eq, %arg2, %c0_i32 : i32
    %1 = arith.extui %0 : i1 to i32
    %c0_i32_0 = arith.constant 0 : i32
    %2 = arith.cmpi ne, %1, %c0_i32_0 : i32
    scf.if %2 {
      %cst_10 = arith.constant 0.000000e+00 : f32
      %12 = vector.broadcast %cst_10 : f32 to vector<16x32xf32>
      %c0_11 = arith.constant 0 : index
      %c0_12 = arith.constant 0 : index
      %13 = vector.load %arg8[%c0_11, %c0_12] : memref<16x32xf32, #tpu.memory_space<vmem>>, vector<16x32xf32>
      tpu.vector_store %arg8[%c0_11, %c0_12], %12 {strides = array<i32>} : memref<16x32xf32, #tpu.memory_space<vmem>>, vector<16x32xf32>,
    } else {
    }
    %c0 = arith.constant 0 : index
    %c0_1 = arith.constant 0 : index
    %3 = vector.load %arg3[%c0, %c0_1] : memref<16x128xbf16, #tpu.memory_space<vmem>>, vector<16x128xbf16>
    %c0_2 = arith.constant 0 : index
    %c0_3 = arith.constant 0 : index
    %4 = vector.load %arg4[%c0_2, %c0_3] : memref<128x32xbf16, #tpu.memory_space<vmem>>, vector<128x32xbf16>
    %c0_4 = arith.constant 0 : index
    %c0_5 = arith.constant 0 : index
    %5 = vector.load %arg8[%c0_4, %c0_5] : memref<16x32xf32, #tpu.memory_space<vmem>>, vector<16x32xf32>
    %cst = arith.constant dense<0.000000e+00> : vector<16x32xf32>
    %6 = tpu.matmul %3, %4, %cst {dimension_numbers = #tpu.dot_dimension_numbers<[1], [0], [0], [1], [0, 0, 1, 1], [], []>} : vector<16x128xbf16>, vector<128x32xbf16>, vector<16x32xf32> -> vector<16x32xf32>
    %7 = arith.addf %5, %6 : vector<16x32xf32>
    %c0_6 = arith.constant 0 : index
    %c0_7 = arith.constant 0 : index
    %8 = vector.load %arg8[%c0_6, %c0_7] : memref<16x32xf32, #tpu.memory_space<vmem>>, vector<16x32xf32>
    tpu.vector_store %arg8[%c0_6, %c0_7], %7 {strides = array<i32>} : memref<16x32xf32, #tpu.memory_space<vmem>>, vector<16x32xf32>,
    %c0_i32_8 = arith.constant 0 : i32
    %9 = arith.cmpi eq, %arg2, %c0_i32_8 : i32
    %10 = arith.extui %9 : i1 to i32
    %c0_i32_9 = arith.constant 0 : i32
    %11 = arith.cmpi ne, %10, %c0_i32_9 : i32
    scf.if %11 {
      %c0_10 = arith.constant 0 : index
      %c0_11 = arith.constant 0 : index
      %12 = vector.load %arg8[%c0_10, %c0_11] : memref<16x32xf32, #tpu.memory_space<vmem>>, vector<16x32xf32>
      %c0_12 = arith.constant 0 : index
      %c0_13 = arith.constant 0 : index
      %13 = vector.load %arg5[%c0_12, %c0_13] : memref<1x32xf32, #tpu.memory_space<vmem>>, vector<1x32xf32>
      %14 = vector.broadcast %13 : vector<1x32xf32> to vector<16x32xf32>
      %15 = arith.addf %12, %14 : vector<16x32xf32>
      %c0_14 = arith.constant 0 : index
      %c0_15 = arith.constant 0 : index
      %16 = vector.load %arg6[%c0_14, %c0_15] : memref<16x32xf32, #tpu.memory_space<vmem>>, vector<16x32xf32>
      %17 = arith.addf %15, %16 : vector<16x32xf32>
      %c0_16 = arith.constant 0 : index
      %c0_17 = arith.constant 0 : index
      %18 = vector.load %arg7[%c0_16, %c0_17] : memref<16x32xf32, #tpu.memory_space<vmem>>, vector<16x32xf32>
      tpu.vector_store %arg7[%c0_16, %c0_17], %17 {strides = array<i32>} : memref<16x32xf32, #tpu.memory_space<vmem>>, vector<16x32xf32>,
    } else {
    }
    return
  }
  func.func @transform_0(%arg0: i32, %arg1: i32, %arg2: i32) -> (i32, i32) {
    %c0_i32 = arith.constant 0 : i32
    return %arg0, %arg2 : i32, i32
  }
  func.func @transform_1(%arg0: i32, %arg1: i32, %arg2: i32) -> (i32, i32) {
    %c0_i32 = arith.constant 0 : i32
    return %arg2, %arg1 : i32, i32
  }
  func.func @transform_2(%arg0: i32, %arg1: i32, %arg2: i32) -> (i32, i32) {
    %c0_i32 = arith.constant 0 : i32
    %c0_i32_0 = arith.constant 0 : i32
    return %c0_i32, %arg1 : i32, i32
  }
  func.func @transform_3(%arg0: i32, %arg1: i32, %arg2: i32) -> (i32, i32) {
    %c0_i32 = arith.constant 0 : i32
    return %arg0, %arg1 : i32, i32
  }
  func.func @transform_4(%arg0: i32, %arg1: i32, %arg2: i32) -> (i32, i32) {
    %c0_i32 = arith.constant 0 : i32
    return %arg0, %arg1 : i32, i32
  }
}

module attributes {stable_mosaic.version = 11 : i64} {
  func.func @_fused_matmul_kernel(%arg0: i32, %arg1: i32, %arg2: i32, %arg3: memref<16x32xf32, #tpu.memory_space<vmem>>, %arg4: memref<256x32xbf16, #tpu.memory_space<vmem>>, %arg5: memref<1x256xf32, #tpu.memory_space<vmem>>, %arg6: memref<1x32xf32, #tpu.memory_space<vmem>>, %arg7: memref<1x32xf32, #tpu.memory_space<vmem>>, %arg8: memref<16x256xf32, #tpu.memory_space<vmem>>, %arg9: memref<16x256xf32, #tpu.memory_space<vmem>>) attributes {dimension_semantics = [#tpu.dimension_semantics<parallel>, #tpu.dimension_semantics<parallel>, #tpu.dimension_semantics<arbitrary>], iteration_bounds = array<i64: 1, 1, 1>, scalar_prefetch = 0 : i64, scratch_operands = 1 : i64, tpu.core_type = #tpu.core_type<tc>, window_params = [{transform_indices = @transform_0, window_bounds = array<i64: 16, 32>}, {transform_indices = @transform_1, window_bounds = array<i64: 256, 32>}, {transform_indices = @transform_2, window_bounds = array<i64: 1, 256>}, {pipeline_mode = #tpu.pipeline_mode<synchronous>, transform_indices = @transform_3, window_bounds = array<i64: 1, 32>}, {pipeline_mode = #tpu.pipeline_mode<synchronous>, transform_indices = @transform_4, window_bounds = array<i64: 1, 32>}, {transform_indices = @transform_5, window_bounds = array<i64: 16, 256>}]} {
    %c0_i32 = arith.constant 0 : i32
    %0 = arith.cmpi eq, %arg2, %c0_i32 : i32
    %1 = arith.extui %0 : i1 to i32
    %c0_i32_0 = arith.constant 0 : i32
    %2 = arith.cmpi ne, %1, %c0_i32_0 : i32
    scf.if %2 {
      %cst_19 = arith.constant 0.000000e+00 : f32
      %37 = vector.broadcast %cst_19 : f32 to vector<16x256xf32>
      %c0_20 = arith.constant 0 : index
      %c0_21 = arith.constant 0 : index
      %38 = vector.load %arg9[%c0_20, %c0_21] : memref<16x256xf32, #tpu.memory_space<vmem>>, vector<16x256xf32>
      tpu.vector_store %arg9[%c0_20, %c0_21], %37 {strides = array<i32>} : memref<16x256xf32, #tpu.memory_space<vmem>>, vector<16x256xf32>,
    } else {
    }
    %c0 = arith.constant 0 : index
    %c0_1 = arith.constant 0 : index
    %3 = vector.load %arg3[%c0, %c0_1] : memref<16x32xf32, #tpu.memory_space<vmem>>, vector<16x32xf32>
    %cst = arith.constant dense<0.000000e+00> : vector<16xf32>
    %4 = vector.multi_reduction <add>, %3, %cst [1] : vector<16x32xf32> to vector<16xf32>
    %5 = vector.shape_cast %4 : vector<16xf32> to vector<16x1xf32>
    %cst_2 = arith.constant 3.200000e+01 : f32
    %6 = vector.broadcast %cst_2 : f32 to vector<16x1xf32>
    %7 = arith.divf %5, %6 : vector<16x1xf32>
    %8 = vector.broadcast %7 : vector<16x1xf32> to vector<16x32xf32>
    %9 = arith.subf %3, %8 : vector<16x32xf32>
    %10 = arith.mulf %9, %9 : vector<16x32xf32>
    %cst_3 = arith.constant dense<0.000000e+00> : vector<16xf32>
    %11 = vector.multi_reduction <add>, %10, %cst_3 [1] : vector<16x32xf32> to vector<16xf32>
    %12 = vector.shape_cast %11 : vector<16xf32> to vector<16x1xf32>
    %cst_4 = arith.constant 3.200000e+01 : f32
    %13 = vector.broadcast %cst_4 : f32 to vector<16x1xf32>
    %14 = arith.divf %12, %13 : vector<16x1xf32>
    %15 = vector.broadcast %7 : vector<16x1xf32> to vector<16x32xf32>
    %16 = arith.subf %3, %15 : vector<16x32xf32>
    %cst_5 = arith.constant 9.99999974E-6 : f32
    %17 = vector.broadcast %cst_5 : f32 to vector<16x1xf32>
    %18 = arith.addf %14, %17 : vector<16x1xf32>
    %19 = math.rsqrt %18 : vector<16x1xf32>
    %20 = vector.broadcast %19 : vector<16x1xf32> to vector<16x32xf32>
    %21 = arith.mulf %16, %20 : vector<16x32xf32>
    %c0_6 = arith.constant 0 : index
    %c0_7 = arith.constant 0 : index
    %22 = vector.load %arg6[%c0_6, %c0_7] : memref<1x32xf32, #tpu.memory_space<vmem>>, vector<1x32xf32>
    %23 = vector.broadcast %22 : vector<1x32xf32> to vector<16x32xf32>
    %24 = arith.mulf %21, %23 : vector<16x32xf32>
    %c0_8 = arith.constant 0 : index
    %c0_9 = arith.constant 0 : index
    %25 = vector.load %arg7[%c0_8, %c0_9] : memref<1x32xf32, #tpu.memory_space<vmem>>, vector<1x32xf32>
    %26 = vector.broadcast %25 : vector<1x32xf32> to vector<16x32xf32>
    %27 = arith.addf %24, %26 : vector<16x32xf32>
    %28 = arith.truncf %27 : vector<16x32xf32> to vector<16x32xbf16>
    %c0_10 = arith.constant 0 : index
    %c0_11 = arith.constant 0 : index
    %29 = vector.load %arg4[%c0_10, %c0_11] : memref<256x32xbf16, #tpu.memory_space<vmem>>, vector<256x32xbf16>
    %c0_12 = arith.constant 0 : index
    %c0_13 = arith.constant 0 : index
    %30 = vector.load %arg9[%c0_12, %c0_13] : memref<16x256xf32, #tpu.memory_space<vmem>>, vector<16x256xf32>
    %cst_14 = arith.constant dense<0.000000e+00> : vector<16x256xf32>
    %31 = tpu.matmul %28, %29, %cst_14 {dimension_numbers = #tpu.dot_dimension_numbers<[1], [1], [0], [0], [0, 0, 1, 0], [], []>} : vector<16x32xbf16>, vector<256x32xbf16>, vector<16x256xf32> -> vector<16x256xf32>
    %32 = arith.addf %30, %31 : vector<16x256xf32>
    %c0_15 = arith.constant 0 : index
    %c0_16 = arith.constant 0 : index
    %33 = vector.load %arg9[%c0_15, %c0_16] : memref<16x256xf32, #tpu.memory_space<vmem>>, vector<16x256xf32>
    tpu.vector_store %arg9[%c0_15, %c0_16], %32 {strides = array<i32>} : memref<16x256xf32, #tpu.memory_space<vmem>>, vector<16x256xf32>,
    %c0_i32_17 = arith.constant 0 : i32
    %34 = arith.cmpi eq, %arg2, %c0_i32_17 : i32
    %35 = arith.extui %34 : i1 to i32
    %c0_i32_18 = arith.constant 0 : i32
    %36 = arith.cmpi ne, %35, %c0_i32_18 : i32
    scf.if %36 {
      %c0_19 = arith.constant 0 : index
      %c0_20 = arith.constant 0 : index
      %37 = vector.load %arg9[%c0_19, %c0_20] : memref<16x256xf32, #tpu.memory_space<vmem>>, vector<16x256xf32>
      %c0_21 = arith.constant 0 : index
      %c0_22 = arith.constant 0 : index
      %38 = vector.load %arg5[%c0_21, %c0_22] : memref<1x256xf32, #tpu.memory_space<vmem>>, vector<1x256xf32>
      %39 = vector.broadcast %38 : vector<1x256xf32> to vector<16x256xf32>
      %40 = arith.addf %37, %39 : vector<16x256xf32>
      %c0_23 = arith.constant 0 : index
      %c0_24 = arith.constant 0 : index
      %41 = vector.load %arg8[%c0_23, %c0_24] : memref<16x256xf32, #tpu.memory_space<vmem>>, vector<16x256xf32>
      tpu.vector_store %arg8[%c0_23, %c0_24], %40 {strides = array<i32>} : memref<16x256xf32, #tpu.memory_space<vmem>>, vector<16x256xf32>,
    } else {
    }
    return
  }
  func.func @transform_0(%arg0: i32, %arg1: i32, %arg2: i32) -> (i32, i32) {
    %c0_i32 = arith.constant 0 : i32
    return %arg0, %arg2 : i32, i32
  }
  func.func @transform_1(%arg0: i32, %arg1: i32, %arg2: i32) -> (i32, i32) {
    %c0_i32 = arith.constant 0 : i32
    return %arg1, %arg2 : i32, i32
  }
  func.func @transform_2(%arg0: i32, %arg1: i32, %arg2: i32) -> (i32, i32) {
    %c0_i32 = arith.constant 0 : i32
    %c0_i32_0 = arith.constant 0 : i32
    return %c0_i32, %arg1 : i32, i32
  }
  func.func @transform_3(%arg0: i32, %arg1: i32, %arg2: i32) -> (i32, i32) {
    %c0_i32 = arith.constant 0 : i32
    %c0_i32_0 = arith.constant 0 : i32
    %c0_i32_1 = arith.constant 0 : i32
    return %c0_i32, %c0_i32_0 : i32, i32
  }
  func.func @transform_4(%arg0: i32, %arg1: i32, %arg2: i32) -> (i32, i32) {
    %c0_i32 = arith.constant 0 : i32
    %c0_i32_0 = arith.constant 0 : i32
    %c0_i32_1 = arith.constant 0 : i32
    return %c0_i32, %c0_i32_0 : i32, i32
  }
  func.func @transform_5(%arg0: i32, %arg1: i32, %arg2: i32) -> (i32, i32) {
    %c0_i32 = arith.constant 0 : i32
    return %arg0, %arg1 : i32, i32
  }
}

</mosaic_0001>

<llo_original>
// kernel: gpt2_forward.11
$region0: #{gpt2_forward.11}
  #allocation0 [shape = 'u32[]', space=smem, size = 0x4, offset = 0x4, fixed_abs, tag = 'smem constant byte address 0x4 - core index']
  #allocation1 [shape = 'u32[144,128]{1,0:T(1,128)}', space=vmem, size = 0x12000, scoped, tag = 'internal scratch']
  #allocation2 [shape = 'f32[16,96]{1,0:T(8,128)}', space=vmem, size = 0x2000, scoped, tag = 'scratch operand']
  %s0 = inlined_call_operand.vmem [shape: f32[16,32], index: 0, kind: input, shape index: {}]
  %s1 = inlined_call_operand.vmem [shape: bf16[32,96], index: 1, kind: input, shape index: {}]
  %s2 = inlined_call_operand.vmem [shape: f32[1,96], index: 2, kind: input, shape index: {}]
  %s3 = inlined_call_operand.vmem [shape: f32[1,32], index: 3, kind: input, shape index: {}]
  %s4 = inlined_call_operand.vmem [shape: f32[1,32], index: 4, kind: input, shape index: {}]
  %s5 = inlined_call_operand.vmem [shape: bf16[16,96], index: 5, kind: output, shape index: {}]
  %s6 = sld [smem:[#allocation0]]
  $region38: #{gpt2_forward.11} parent=0
    _
  %s8 = ssub.s32 1, %s6
  %s9 = scalar_select 0, %s8, %s6
  // Predicated region
  $region2: #{gpt2_forward.11} parent=0 // pred_check
    _
  $region3: #{gpt2_forward.11} parent=0 // pred_check_branch
    %11 = sbr.rel (0) target = $region5
  $region4: #{gpt2_forward.11} parent=0 // pred_region
    _
  $region5: #{gpt2_forward.11} parent=0 // pred_fallthru
    _
  // Predicated region
  $region6: #{gpt2_forward.11} parent=0 // pred_check
    _
  $region7: #{gpt2_forward.11} parent=0 // pred_check_branch
    %13 = sbr.rel (0) target = $region9
  $region8: #{gpt2_forward.11} parent=0 // pred_region
    _
  $region9: #{gpt2_forward.11} parent=0 // pred_fallthru
    _
  // Predicated region
  $region10: #{gpt2_forward.11} parent=0 // pred_check
    _
  $region11: #{gpt2_forward.11} parent=0 // pred_check_branch
    %15 = sbr.rel (0) target = $region13
  $region12: #{gpt2_forward.11} parent=0 // pred_region
    _
  $region13: #{gpt2_forward.11} parent=0 // pred_fallthru
    _
  // Predicated region
  $region14: #{gpt2_forward.11} parent=0 // pred_check
    _
  $region15: #{gpt2_forward.11} parent=0 // pred_check_branch
    %17 = sbr.rel (0) target = $region17
  $region16: #{gpt2_forward.11} parent=0 // pred_region
    _
  $region17: #{gpt2_forward.11} parent=0 // pred_fallthru
    _
  // Predicated region
  $region18: #{gpt2_forward.11} parent=0 // pred_check
    _
  $region19: #{gpt2_forward.11} parent=0 // pred_check_branch
    %19 = sbr.rel (0) target = $region21
  $region20: #{gpt2_forward.11} parent=0 // pred_region
    _
  $region21: #{gpt2_forward.11} parent=0 // pred_fallthru
    _
  %p21 = scmp.eq.s32.totalorder 0, 0
  // Predicated region
  $region22: #{gpt2_forward.11} parent=0 // pred_check
    %p22 = pneg %p21
  $region23: #{gpt2_forward.11} parent=0 // pred_check_branch
    %24 = sbr.rel (%p22) target = $region25
  $region24: #{gpt2_forward.11} parent=0 // pred_region
    %vm25 = vcmask 785408
    %26 = vst.msk [vmem:[#allocation2] sm:$0xff] %vm25, 0.0
    %27 = vst.msk [vmem:[#allocation2 + $0x8] sm:$0xff] %vm25, 0.0
  $region25: #{gpt2_forward.11} parent=0 // pred_fallthru
    _
  %v28 = vld [vmem:[%s0] sm:$0xff]
  %v29 = vld [vmem:[%s0 + $0x8] sm:$0xff]
  %vm30 = vcmask 261120
  %v31 = vsel %vm30, %v28, 0.0
  %32 = vadd.xlane.f32.xlu0 %v31
  %v33 = vpop.xlane.xlu0 %32
  %v34 = vsel %vm30, %v29, 0.0
  %35 = vadd.xlane.f32.xlu0 %v34
  %v36 = vpop.xlane.xlu0 %35
  %v37 = vrcp.pop 32.0
  %v38 = vmul.f32 %v33, %v37
  %v39 = vmul.f32 %v36, %v37
  %v40 = vsub.f32 %v28, %v38
  %v41 = vsub.f32 %v29, %v39
  %v42 = vmul.f32 %v40, %v40
  %v43 = vmul.f32 %v41, %v41
  %v44 = vsel %vm30, %v42, 0.0
  %45 = vadd.xlane.f32.xlu0 %v44
  %v46 = vpop.xlane.xlu0 %45
  %v47 = vsel %vm30, %v43, 0.0
  %48 = vadd.xlane.f32.xlu0 %v47
  %v49 = vpop.xlane.xlu0 %48
  %v50 = vmul.f32 %v46, %v37
  %v51 = vmul.f32 %v49, %v37
  %v52 = vadd.f32 %v50, 1e-05
  %v53 = vadd.f32 %v51, 1e-05
  %v54 = vrsqrt.pop %v52
  %v55 = vrsqrt.pop %v53
  %v56 = vmul.f32 %v40, %v54
  %v57 = vmul.f32 %v41, %v55
  %v58 = vld [vmem:[%s3] sm:$0x1]
  %v60 = vlaneseq
  %v61 = vshrl.u32 %v60, 7
  %v62 = vsub.s32 0, %v61
  %v63 = vrot.slane %v58, %v62
  %v65 = vmul.f32 %v56, %v63
  %v66 = vmul.f32 %v57, %v63
  %v67 = vld [vmem:[%s4] sm:$0x1]
  %v69 = vlaneseq
  %v70 = vshrl.u32 %v69, 7
  %v71 = vsub.s32 0, %v70
  %v72 = vrot.slane %v67, %v71
  %v74 = vadd.f32 %v65, %v72
  %v75 = vadd.f32 %v66, %v72
  %v76 = vpack.c.bf16 %v75, %v74
  %v77 = vld [vmem:[%s1] sm:$0xf]
  %v78 = vld [vmem:[%s1 + $0x4] sm:$0xf]
  %v79 = vld [vmem:[%s1 + $0x8] sm:$0xf]
  %v80 = vld [vmem:[%s1 + $0xc] sm:$0xf]
  %v81 = vld [vmem:[#allocation2] sm:$0xff]
  %v82 = vld [vmem:[#allocation2 + $0x8] sm:$0xff]
  %v87 = vunpack.c.l.b16 %v77
  %v88 = vunpack.c.l.b16 %v78
  %v89 = vunpack.c.l.b16 %v79
  %v90 = vunpack.c.l.b16 %v80
  %v91 = vpack.c.b16 %v88, %v87
  %v92 = vpack.c.b16 %v90, %v89
  %v96 = vsel %vm30, %v76, 0
  %98 = vmatprep.subr.bf16.mxu0 0
  %99 = vmatpush1.bf16.msra.mxu0 %v91
  %100 = vmatprep.subr.bf16.mxu0 0
  %101 = vmatpush1.bf16.msra.mxu0 %v92
  %102 = vmatprep.subr.bf16.mxu0 0
  %103 = vmatpush1.bf16.msra.mxu0 0
  %104 = vmatprep.subr.bf16.mxu0 0
  %105 = vmatpush1.bf16.msra.mxu0 0
  %106 = vmatprep.subr.bf16.mxu0 0
  %107 = vmatpush1.bf16.msra.mxu0 0
  %108 = vmatprep.subr.bf16.mxu0 0
  %109 = vmatpush1.bf16.msra.mxu0 0
  %110 = vmatprep.subr.bf16.mxu0 0
  %111 = vmatpush1.bf16.msra.mxu0 0
  %112 = vmatprep.subr.bf16.mxu0 0
  %113 = vmatpush1.bf16.msra.mxu0 0
  %114 = vmatprep.subr.bf16.mxu0 0
  %115 = vmatpush1.bf16.msra.mxu0 0
  %116 = vmatprep.subr.bf16.mxu0 0
  %117 = vmatpush1.bf16.msra.mxu0 0
  %118 = vmatprep.subr.bf16.mxu0 0
  %119 = vmatpush1.bf16.msra.mxu0 0
  %120 = vmatprep.subr.bf16.mxu0 0
  %121 = vmatpush1.bf16.msra.mxu0 0
  %122 = vmatprep.subr.bf16.mxu0 0
  %123 = vmatpush1.bf16.msra.mxu0 0
  %124 = vmatprep.subr.bf16.mxu0 0
  %125 = vmatpush1.bf16.msra.mxu0 0
  %126 = vmatprep.subr.bf16.mxu0 0
  %127 = vmatpush1.bf16.msra.mxu0 0
  %128 = vmatprep.subr.bf16.mxu0 0
  %129 = vmatpush1.bf16.msra.mxu0 0
  %130 = vmatprep.mubr.bf16.mxu0 0
  %131 = vmatmul.mubr.bf16.gmra.mrb[0].mxu0 %v96
  %v132 = vpop.f32.mrb[0].mxu0
  %v133 = vadd.f32 0.0, %v132
  %v134 = vpop.f32.mrb[0].mxu0
  %v135 = vpop.f32.mrb[0].mxu0
  %v136 = vadd.f32 0.0, %v135
  %v137 = vpop.f32.mrb[0].mxu0
  %138 = vdwg.mxu0
  %v139 = vadd.f32 %v81, %v133
  %v140 = vadd.f32 %v82, %v136
  %vm141 = vcmask 785408
  %142 = vst.msk [vmem:[#allocation2] sm:$0xff] %vm141, %v139
  %143 = vst.msk [vmem:[#allocation2 + $0x8] sm:$0xff] %vm141, %v140
  // Predicated region
  $region26: #{gpt2_forward.11} parent=0 // pred_check
    %p144 = pneg %p21
  $region27: #{gpt2_forward.11} parent=0 // pred_check_branch
    %146 = sbr.rel (%p144) target = $region29
  $region28: #{gpt2_forward.11} parent=0 // pred_region
    %v147 = vld [vmem:[#allocation2] sm:$0xff]
    %v148 = vld [vmem:[#allocation2 + $0x8] sm:$0xff]
    %v149 = vld [vmem:[%s2] sm:$0x1]
    %v151 = vlaneseq
    %v152 = vshrl.u32 %v151, 7
    %v153 = vsub.s32 0, %v152
    %v154 = vrot.slane %v149, %v153
    %v156 = vadd.f32 %v147, %v154
    %v157 = vadd.f32 %v148, %v154
    %v158 = vpack.c.bf16 %v157, %v156
    %v160 = vunpack.c.l.b16 %v158
    %v161 = vunpack.c.h.b16 %v158
    %v162 = vpack.c.b16 %v160, %v160
    %v163 = vpack.c.b16 %v161, %v161
    %vm166 = vcmask 781312
    %167 = vst.msk [vmem:[%s5] sm:$0xf] %vm166, %v162
    %168 = vst.msk [vmem:[%s5 + $0x4] sm:$0xf] %vm166, %v163
  $region29: #{gpt2_forward.11} parent=0 // pred_fallthru
    _
  // Predicated region
  $region30: #{gpt2_forward.11} parent=0 // pred_check
    _
  $region31: #{gpt2_forward.11} parent=0 // pred_check_branch
    %170 = sbr.rel (0) target = $region33
  $region32: #{gpt2_forward.11} parent=0 // pred_region
    _
  $region33: #{gpt2_forward.11} parent=0 // pred_fallthru
    _
  // Predicated region
  $region34: #{gpt2_forward.11} parent=0 // pred_check
    _
  $region35: #{gpt2_forward.11} parent=0 // pred_check_branch
    %172 = sbr.rel (0) target = $region37
  $region36: #{gpt2_forward.11} parent=0 // pred_region
    _
  $region37: #{gpt2_forward.11} parent=0 // pred_fallthru
    _

// kernel: gpt2_forward.13
$region0: #{gpt2_forward.13}
  #allocation0 [shape = 'u32[]', space=smem, size = 0x4, offset = 0x4, fixed_abs, tag = 'smem constant byte address 0x4 - core index']
  #allocation1 [shape = 'u32[144,128]{1,0:T(1,128)}', space=vmem, size = 0x12000, scoped, tag = 'internal scratch']
  #allocation2 [shape = 'f32[16,32]{1,0:T(8,128)}', space=vmem, size = 0x2000, scoped, tag = 'scratch operand']
  %s0 = inlined_call_operand.vmem [shape: bf16[16,32], index: 0, kind: input, shape index: {}]
  %s1 = inlined_call_operand.vmem [shape: bf16[32,32], index: 1, kind: input, shape index: {}]
  %s2 = inlined_call_operand.vmem [shape: f32[1,32], index: 2, kind: input, shape index: {}]
  %s3 = inlined_call_operand.vmem [shape: f32[16,32], index: 3, kind: input, shape index: {}]
  %s4 = inlined_call_operand.vmem [shape: f32[16,32], index: 4, kind: output, shape index: {}]
  %s5 = sld [smem:[#allocation0]]
  $region34: #{gpt2_forward.13} parent=0
    _
  %s7 = ssub.s32 1, %s5
  %s8 = scalar_select 0, %s7, %s5
  // Predicated region
  $region2: #{gpt2_forward.13} parent=0 // pred_check
    _
  $region3: #{gpt2_forward.13} parent=0 // pred_check_branch
    %10 = sbr.rel (0) target = $region5
  $region4: #{gpt2_forward.13} parent=0 // pred_region
    _
  $region5: #{gpt2_forward.13} parent=0 // pred_fallthru
    _
  // Predicated region
  $region6: #{gpt2_forward.13} parent=0 // pred_check
    _
  $region7: #{gpt2_forward.13} parent=0 // pred_check_branch
    %12 = sbr.rel (0) target = $region9
  $region8: #{gpt2_forward.13} parent=0 // pred_region
    _
  $region9: #{gpt2_forward.13} parent=0 // pred_fallthru
    _
  // Predicated region
  $region10: #{gpt2_forward.13} parent=0 // pred_check
    _
  $region11: #{gpt2_forward.13} parent=0 // pred_check_branch
    %14 = sbr.rel (0) target = $region13
  $region12: #{gpt2_forward.13} parent=0 // pred_region
    _
  $region13: #{gpt2_forward.13} parent=0 // pred_fallthru
    _
  // Predicated region
  $region14: #{gpt2_forward.13} parent=0 // pred_check
    _
  $region15: #{gpt2_forward.13} parent=0 // pred_check_branch
    %16 = sbr.rel (0) target = $region17
  $region16: #{gpt2_forward.13} parent=0 // pred_region
    _
  $region17: #{gpt2_forward.13} parent=0 // pred_fallthru
    _
  %p18 = scmp.eq.s32.totalorder 0, 0
  // Predicated region
  $region18: #{gpt2_forward.13} parent=0 // pred_check
    %p19 = pneg %p18
  $region19: #{gpt2_forward.13} parent=0 // pred_check_branch
    %21 = sbr.rel (%p19) target = $region21
  $region20: #{gpt2_forward.13} parent=0 // pred_region
    %vm22 = vcmask 261120
    %23 = vst.msk [vmem:[#allocation2] sm:$0xff] %vm22, 0.0
    %24 = vst.msk [vmem:[#allocation2 + $0x8] sm:$0xff] %vm22, 0.0
  $region21: #{gpt2_forward.13} parent=0 // pred_fallthru
    _
  %v25 = vld [vmem:[%s0] sm:$0xf]
  %v26 = vld [vmem:[%s0 + $0x4] sm:$0xf]
  %v27 = vld [vmem:[%s1] sm:$0xf]
  %v28 = vld [vmem:[%s1 + $0x4] sm:$0xf]
  %v29 = vld [vmem:[%s1 + $0x8] sm:$0xf]
  %v30 = vld [vmem:[%s1 + $0xc] sm:$0xf]
  %v31 = vld [vmem:[#allocation2] sm:$0xff]
  %v32 = vld [vmem:[#allocation2 + $0x8] sm:$0xff]
  %v35 = vunpack.c.l.b16 %v25
  %v36 = vunpack.c.l.b16 %v26
  %v37 = vpack.c.b16 %v36, %v35
  %v42 = vunpack.c.l.b16 %v27
  %v43 = vunpack.c.l.b16 %v28
  %v44 = vunpack.c.l.b16 %v29
  %v45 = vunpack.c.l.b16 %v30
  %v46 = vpack.c.b16 %v43, %v42
  %v47 = vpack.c.b16 %v45, %v44
  %vm50 = vcmask 261120
  %v52 = vsel %vm50, %v37, 0
  %54 = vmatprep.subr.bf16.mxu0 0
  %55 = vmatpush1.bf16.msra.mxu0 %v46
  %56 = vmatprep.subr.bf16.mxu0 0
  %57 = vmatpush1.bf16.msra.mxu0 %v47
  %58 = vmatprep.subr.bf16.mxu0 0
  %59 = vmatpush1.bf16.msra.mxu0 0
  %60 = vmatprep.subr.bf16.mxu0 0
  %61 = vmatpush1.bf16.msra.mxu0 0
  %62 = vmatprep.subr.bf16.mxu0 0
  %63 = vmatpush1.bf16.msra.mxu0 0
  %64 = vmatprep.subr.bf16.mxu0 0
  %65 = vmatpush1.bf16.msra.mxu0 0
  %66 = vmatprep.subr.bf16.mxu0 0
  %67 = vmatpush1.bf16.msra.mxu0 0
  %68 = vmatprep.subr.bf16.mxu0 0
  %69 = vmatpush1.bf16.msra.mxu0 0
  %70 = vmatprep.subr.bf16.mxu0 0
  %71 = vmatpush1.bf16.msra.mxu0 0
  %72 = vmatprep.subr.bf16.mxu0 0
  %73 = vmatpush1.bf16.msra.mxu0 0
  %74 = vmatprep.subr.bf16.mxu0 0
  %75 = vmatpush1.bf16.msra.mxu0 0
  %76 = vmatprep.subr.bf16.mxu0 0
  %77 = vmatpush1.bf16.msra.mxu0 0
  %78 = vmatprep.subr.bf16.mxu0 0
  %79 = vmatpush1.bf16.msra.mxu0 0
  %80 = vmatprep.subr.bf16.mxu0 0
  %81 = vmatpush1.bf16.msra.mxu0 0
  %82 = vmatprep.subr.bf16.mxu0 0
  %83 = vmatpush1.bf16.msra.mxu0 0
  %84 = vmatprep.subr.bf16.mxu0 0
  %85 = vmatpush1.bf16.msra.mxu0 0
  %86 = vmatprep.mubr.bf16.mxu0 0
  %87 = vmatmul.mubr.bf16.gmra.mrb[0].mxu0 %v52
  %v88 = vpop.f32.mrb[0].mxu0
  %v89 = vadd.f32 0.0, %v88
  %v90 = vpop.f32.mrb[0].mxu0
  %v91 = vpop.f32.mrb[0].mxu0
  %v92 = vadd.f32 0.0, %v91
  %v93 = vpop.f32.mrb[0].mxu0
  %94 = vdwg.mxu0
  %v95 = vadd.f32 %v31, %v89
  %v96 = vadd.f32 %v32, %v92
  %97 = vst.msk [vmem:[#allocation2] sm:$0xff] %vm50, %v95
  %98 = vst.msk [vmem:[#allocation2 + $0x8] sm:$0xff] %vm50, %v96
  // Predicated region
  $region22: #{gpt2_forward.13} parent=0 // pred_check
    %p99 = pneg %p18
  $region23: #{gpt2_forward.13} parent=0 // pred_check_branch
    %101 = sbr.rel (%p99) target = $region25
  $region24: #{gpt2_forward.13} parent=0 // pred_region
    %v102 = vld [vmem:[#allocation2] sm:$0xff]
    %v103 = vld [vmem:[#allocation2 + $0x8] sm:$0xff]
    %v104 = vld [vmem:[%s2] sm:$0x1]
    %v106 = vlaneseq
    %v107 = vshrl.u32 %v106, 7
    %v108 = vsub.s32 0, %v107
    %v109 = vrot.slane %v104, %v108
    %v111 = vadd.f32 %v102, %v109
    %v112 = vadd.f32 %v103, %v109
    %v113 = vld [vmem:[%s3] sm:$0xff]
    %v114 = vld [vmem:[%s3 + $0x8] sm:$0xff]
    %v115 = vadd.f32 %v111, %v113
    %v116 = vadd.f32 %v112, %v114
    %117 = vst.msk [vmem:[%s4] sm:$0xff] %vm50, %v115
    %118 = vst.msk [vmem:[%s4 + $0x8] sm:$0xff] %vm50, %v116
  $region25: #{gpt2_forward.13} parent=0 // pred_fallthru
    _
  // Predicated region
  $region26: #{gpt2_forward.13} parent=0 // pred_check
    _
  $region27: #{gpt2_forward.13} parent=0 // pred_check_branch
    %120 = sbr.rel (0) target = $region29
  $region28: #{gpt2_forward.13} parent=0 // pred_region
    _
  $region29: #{gpt2_forward.13} parent=0 // pred_fallthru
    _
  // Predicated region
  $region30: #{gpt2_forward.13} parent=0 // pred_check
    _
  $region31: #{gpt2_forward.13} parent=0 // pred_check_branch
    %122 = sbr.rel (0) target = $region33
  $region32: #{gpt2_forward.13} parent=0 // pred_region
    _
  $region33: #{gpt2_forward.13} parent=0 // pred_fallthru
    _

// kernel: gpt2_forward.12
$region0: #{gpt2_forward.12}
  #allocation0 [shape = 'u32[]', space=smem, size = 0x4, offset = 0x4, fixed_abs, tag = 'smem constant byte address 0x4 - core index']
  #allocation1 [shape = 'u32[144,128]{1,0:T(1,128)}', space=vmem, size = 0x12000, scoped, tag = 'internal scratch']
  %s0 = inlined_call_operand.vmem [shape: bf16[2,8,96], index: 0, kind: input, shape index: {}, may-alias: {0,1}]
  %s1 = inlined_call_operand.vmem [shape: bf16[2,8,96], index: 1, kind: input, shape index: {}, may-alias: {0,1}]
  %s2 = inlined_call_operand.vmem [shape: bf16[2,8,32], index: 2, kind: output, shape index: {}]
  %s3 = sld [smem:[#allocation0]]
  $region41: #{gpt2_forward.12} parent=0
    _
  %s5 = ssub.s32 1, %s3
  %s6 = scalar_select 0, %s5, %s3
  loop: start=0, step=1, limit=4
  $region2: #{gpt2_forward.12} parent=0 // loop_pre_header
    _
  $region3: #{gpt2_forward.12} parent=0 // loop_header
    %s8 = sphi 0, %s12
    %p9 = scmp.ge.s32.totalorder %s8, 4
    %s15 = sphi 0, %s27
    %s16 = sphi 0, %s23
    %s17 = sphi 0, %s15
    %s18 = sphi 0, %s16
    %s19 = sphi 0, %s17
    %s20 = sphi 0, %s18
    %s32 = sphi 0, %s34
    %s35 = sphi 0, %s32
    %s36 = sphi 0, %s35
    %s52 = sphi 0, %s36
    %s58 = sphi 0, %s60
    %s61 = sphi 0, %s58
    %s62 = sphi 0, %s61
    %s78 = sphi 0, %s62
    %s86 = sphi 0, %s88
    %s89 = sphi 0, %s86
    %s90 = sphi 0, %s89
    %s106 = sphi 0, %s90
  $region4: #{gpt2_forward.12} parent=0 // loop_header_branch
    %11 = sbr.rel (%p9) target = $region8
  $region5: #{gpt2_forward.12} parent=0 // loop_body
    %s13 = ssub.s32 %s8, 1
    %s14 = ssub.s32 %s8, 2
    %s21 = sadd.s32 1, %s16
    %p22 = scmp.ge.s32.totalorder %s21, 1
    %s23 = scalar_select %p22, 0, %s21
    %s24 = sadd.s32 1, %s15
    %s25 = scalar_select %p22, %s24, %s15
    %p26 = scmp.ge.s32.totalorder %s25, 2
    %s27 = scalar_select %p26, 0, %s25
    %s28 = ssub.s32 %s15, %s27
    %s29 = ssub.s32 %s16, %s23
    %s30 = sor.u32 %s28, %s29
    %p31 = scmp.eq.s32.totalorder %s30, 0
    %s33 = sadd.s32 %s32, 1
    %s34 = scalar_select %p31, %s32, %s33
    %p37 = pneg %p31
    %p38 = scmp.eq.s32.totalorder %s8, 1
    %p39 = por %p37, %p38
    %p40 = scmp.ne.s32.totalorder %s32, %s35
    %p41 = scmp.eq.s32.totalorder %s8, 0
    %p42 = por %p40, %p41
    %p43 = scmp.ne.s32.totalorder %s32, %s35
    %p44 = scmp.eq.s32.totalorder %s13, 1
    %p45 = por %p43, %p44
    %p46 = scmp.ne.s32.totalorder %s35, %s36
    %p47 = scmp.eq.s32.totalorder %s13, 0
    %p48 = por %p46, %p47
    %p49 = scmp.ne.s32.totalorder %s35, %s36
    %p50 = scmp.eq.s32.totalorder %s14, 1
    %p51 = por %p49, %p50
    %p53 = scmp.ne.s32.totalorder %s36, %s52
    %p54 = scmp.eq.s32.totalorder %s14, 0
    %p55 = por %p53, %p54
    %s56 = ssub.s32 %s15, %s27
    %p57 = scmp.eq.s32.totalorder %s56, 0
    %s59 = sadd.s32 %s58, 1
    %s60 = scalar_select %p57, %s58, %s59
    %p63 = pneg %p57
    %p64 = scmp.eq.s32.totalorder %s8, 1
    %p65 = por %p63, %p64
    %p66 = scmp.ne.s32.totalorder %s58, %s61
    %p67 = scmp.eq.s32.totalorder %s8, 0
    %p68 = por %p66, %p67
    %p69 = scmp.ne.s32.totalorder %s58, %s61
    %p70 = scmp.eq.s32.totalorder %s13, 1
    %p71 = por %p69, %p70
    %p72 = scmp.ne.s32.totalorder %s61, %s62
    %p73 = scmp.eq.s32.totalorder %s13, 0
    %p74 = por %p72, %p73
    %p75 = scmp.ne.s32.totalorder %s61, %s62
    %p76 = scmp.eq.s32.totalorder %s14, 1
    %p77 = por %p75, %p76
    %p79 = scmp.ne.s32.totalorder %s62, %s78
    %p80 = scmp.eq.s32.totalorder %s14, 0
    %p81 = por %p79, %p80
    %s82 = ssub.s32 %s15, %s27
    %s83 = ssub.s32 %s16, %s23
    %s84 = sor.u32 %s82, %s83
    %p85 = scmp.eq.s32.totalorder %s84, 0
    %s87 = sadd.s32 %s86, 1
    %s88 = scalar_select %p85, %s86, %s87
    %p91 = pneg %p85
    %p92 = scmp.eq.s32.totalorder %s8, 1
    %p93 = por %p91, %p92
    %p94 = scmp.ne.s32.totalorder %s86, %s89
    %p95 = scmp.eq.s32.totalorder %s8, 0
    %p96 = por %p94, %p95
    %p97 = scmp.ne.s32.totalorder %s86, %s89
    %p98 = scmp.eq.s32.totalorder %s13, 1
    %p99 = por %p97, %p98
    %p100 = scmp.ne.s32.totalorder %s89, %s90
    %p101 = scmp.eq.s32.totalorder %s13, 0
    %p102 = por %p100, %p101
    %p103 = scmp.ne.s32.totalorder %s89, %s90
    %p104 = scmp.eq.s32.totalorder %s14, 1
    %p105 = por %p103, %p104
    %p107 = scmp.ne.s32.totalorder %s90, %s106
    %p108 = scmp.eq.s32.totalorder %s14, 0
    %p109 = por %p107, %p108
    %p110 = scmp.le.s32.totalorder 1, %s8
    %p111 = scmp.lt.s32.totalorder %s8, 3
    %p112 = pnand %p110, %p111
    %p113 = pneg %p112
    // Predicated region
    $region9: #{gpt2_forward.12} parent=5 // pred_check
      _
    $region10: #{gpt2_forward.12} parent=5 // pred_check_branch
      %115 = sbr.rel (%p112) target = $region12
    $region11: #{gpt2_forward.12} parent=5 // pred_region
      %s116 = ssub.s32 %s8, 1
    $region12: #{gpt2_forward.12} parent=5 // pred_fallthru
      _
    %p117 = scmp.lt.s32.totalorder %s8, 2
    // Predicated region
    $region13: #{gpt2_forward.12} parent=5 // pred_check
      %p118 = pneg %p117
    $region14: #{gpt2_forward.12} parent=5 // pred_check_branch
      %120 = sbr.rel (%p118) target = $region16
    $region15: #{gpt2_forward.12} parent=5 // pred_region
      // Predicated region
      $region17: #{gpt2_forward.12} parent=15 // pred_check
        %p121 = pneg %p42
      $region18: #{gpt2_forward.12} parent=15 // pred_check_branch
        %123 = sbr.rel (%p121) target = $region20
      $region19: #{gpt2_forward.12} parent=15 // pred_region
        %p124 = scmp.lt.s32.totalorder %s15, 1
        %s125 = scalar_select %p124, %s15, 1
        %p126 = scmp.lt.s32.totalorder %s16, 0
        %s127 = scalar_select %p126, %s16, 0
        %s128 = sadd.s32 %s127, %s125
        %s129 = smul.addr %s128, 4
        %s130 = scalar_lea.vmem %s0, %s129
      $region20: #{gpt2_forward.12} parent=15 // pred_fallthru
        _
      // Predicated region
      $region21: #{gpt2_forward.12} parent=15 // pred_check
        %p131 = pneg %p68
      $region22: #{gpt2_forward.12} parent=15 // pred_check_branch
        %133 = sbr.rel (%p131) target = $region24
      $region23: #{gpt2_forward.12} parent=15 // pred_region
        %p134 = scmp.lt.s32.totalorder %s15, 1
        %s135 = scalar_select %p134, %s15, 1
        %s136 = smul.addr %s135, 4
        %s137 = scalar_lea.vmem %s1, %s136
      $region24: #{gpt2_forward.12} parent=15 // pred_fallthru
        _
    $region16: #{gpt2_forward.12} parent=5 // pred_fallthru
      _
    %p138 = scmp.le.s32.totalorder 1, %s8
    %p139 = scmp.lt.s32.totalorder %s8, 3
    %p140 = pnand %p138, %p139
    %p141 = pneg %p140
    // Predicated region
    $region25: #{gpt2_forward.12} parent=5 // pred_check
      _
    $region26: #{gpt2_forward.12} parent=5 // pred_check_branch
      %143 = sbr.rel (%p140) target = $region28
    $region27: #{gpt2_forward.12} parent=5 // pred_region
      %s144 = ssub.s32 %s8, 1
      %p145 = scmp.lt.s32.totalorder %s17, 1
      %s146 = scalar_select %p145, %s17, 1
      %p147 = scmp.lt.s32.totalorder %s18, 0
      %s148 = scalar_select %p147, %s18, 0
      %s149 = sadd.s32 %s148, %s146
      %s150 = smul.addr %s149, 4
      %s151 = scalar_lea.vmem %s0, %s150
      %p152 = pneg %p48
      %p153 = pneg %p45
      %p154 = scmp.lt.s32.totalorder %s17, 1
      %s155 = scalar_select %p154, %s17, 1
      %s156 = smul.addr %s155, 4
      %s157 = scalar_lea.vmem %s1, %s156
      %p158 = pneg %p74
      %p159 = pneg %p71
      %p160 = pneg %p102
      %p161 = pneg %p99
      %p162 = scmp.lt.s32.totalorder %s17, 1
      %s163 = scalar_select %p162, %s17, 1
      %p164 = scmp.lt.s32.totalorder %s18, 0
      %s165 = scalar_select %p164, %s18, 0
      %s166 = sadd.s32 %s165, %s163
      %s167 = smul.addr %s166, 4
      %s168 = scalar_lea.vmem %s2, %s167
      %p169 = scmp.lt.s32.totalorder %s17, 1
      %s170 = scalar_select %p169, %s17, 1
      %p171 = scmp.lt.s32.totalorder %s18, 0
      %s172 = scalar_select %p171, %s18, 0
      %s173 = sadd.s32 %s172, %s170
      %s174 = smul.addr %s173, 4
      %s175 = scalar_lea.vmem %s0, %s174
      %p176 = scmp.lt.s32.totalorder %s17, 1
      %s177 = scalar_select %p176, %s17, 1
      %s178 = smul.addr %s177, 4
      %s179 = scalar_lea.vmem %s1, %s178
      %p180 = scmp.lt.s32.totalorder %s17, 1
      %s181 = scalar_select %p180, %s17, 1
      %p182 = scmp.lt.s32.totalorder %s18, 0
      %s183 = scalar_select %p182, %s18, 0
      %s184 = sadd.s32 %s183, %s181
      %s185 = smul.addr %s184, 4
      %s186 = scalar_lea.vmem %s2, %s185
      %v188 = vld [vmem:[%s175] sm:$0xf]
      %v189 = vld [vmem:[%s179] sm:$0xf]
      %s190 = smul.u32 %s18, 8
      %v191 = vlaneseq
      %v192 = vshrl.u32 %v191, 7
      %v193 = vstv %s190
      %v194 = vadd.s32 %v193, %v192
      %v195 = vlaneseq
      %v196 = vand.u32 %v195, 127
      %vm197 = vcmp.le.s32.totalorder %v196, %v194
      %v199 = vunpack.c.l.b16 %v189
      %v200 = vpack.c.b16 %v199, %v199
      %201 = vrot.lane.b32.xlu0 %v200, 96
      %v202 = vpop.permute.xlu0 %201
      %vm203 = vcmask 64512
      %v205 = vsel %vm203, %v188, 0
      %v208 = vsel %vm203, %v202, 0
      %210 = vmatprep.subr.bf16.mxu0 0
      %211 = vmatpush1.bf16.xpose.msra.mxu0 %v208
      %212 = vmatprep.subr.bf16.mxu0 0
      %213 = vmatpush1.bf16.xpose.msra.mxu0 0
      %214 = vmatprep.subr.bf16.mxu0 0
      %215 = vmatpush1.bf16.xpose.msra.mxu0 0
      %216 = vmatprep.subr.bf16.mxu0 0
      %217 = vmatpush1.bf16.xpose.msra.mxu0 0
      %218 = vmatprep.subr.bf16.mxu0 0
      %219 = vmatpush1.bf16.xpose.msra.mxu0 0
      %220 = vmatprep.subr.bf16.mxu0 0
      %221 = vmatpush1.bf16.xpose.msra.mxu0 0
      %222 = vmatprep.subr.bf16.mxu0 0
      %223 = vmatpush1.bf16.xpose.msra.mxu0 0
      %224 = vmatprep.subr.bf16.mxu0 0
      %225 = vmatpush1.bf16.xpose.msra.mxu0 0
      %226 = vmatprep.subr.bf16.mxu0 0
      %227 = vmatpush1.bf16.xpose.msra.mxu0 0
      %228 = vmatprep.subr.bf16.mxu0 0
      %229 = vmatpush1.bf16.xpose.msra.mxu0 0
      %230 = vmatprep.subr.bf16.mxu0 0
      %231 = vmatpush1.bf16.xpose.msra.mxu0 0
      %232 = vmatprep.subr.bf16.mxu0 0
      %233 = vmatpush1.bf16.xpose.msra.mxu0 0
      %234 = vmatprep.subr.bf16.mxu0 0
      %235 = vmatpush1.bf16.xpose.msra.mxu0 0
      %236 = vmatprep.subr.bf16.mxu0 0
      %237 = vmatpush1.bf16.xpose.msra.mxu0 0
      %238 = vmatprep.subr.bf16.mxu0 0
      %239 = vmatpush1.bf16.xpose.msra.mxu0 0
      %240 = vmatprep.subr.bf16.mxu0 0
      %241 = vmatpush1.bf16.xpose.msra.mxu0 0
      %242 = vmatprep.mubr.bf16.mxu0 0
      %243 = vmatmul.mubr.bf16.gmra.mrb[0].mxu0 %v205
      %v244 = vpop.f32.mrb[0].mxu0
      %v245 = vadd.f32 0.0, %v244
      %v246 = vpop.f32.mrb[0].mxu0
      %v247 = vpop.f32.mrb[0].mxu0
      %v248 = vpop.f32.mrb[0].mxu0
      %249 = vdwg.mxu0
      %v250 = vmul.f32 %v245, 0.35355338
      %v251 = vsel %vm197, %v250, -1e+30
      %v252 = vsel %vm203, %v251, -inf
      %253 = vmax.xlane.f32.xlu0 %v252
      %v254 = vpop.xlane.xlu0 %253
      %v255 = vsub.f32 %v251, %v254
      %v256 = vmul.f32 %v255, 1.442695
      %v257 = vpow.pop %v256
      %v258 = vsel %vm203, %v257, 0.0
      %259 = vadd.xlane.f32.xlu0 %v258
      %v260 = vpop.xlane.xlu0 %259
      %v261 = vpack.c.bf16 %v257, %v257
      %262 = vrot.lane.b32.xlu0 %v200, 64
      %v263 = vpop.permute.xlu0 %262
      %v265 = vsel %vm203, %v261, 0
      %vm267 = vcmask 1043456
      %v269 = vsel %vm267, %v263, 0
      %271 = vmatprep.subr.bf16.mxu0 0
      %272 = vmatpush1.bf16.msra.mxu0 %v269
      %273 = vmatprep.subr.bf16.mxu0 0
      %274 = vmatpush1.bf16.msra.mxu0 0
      %275 = vmatprep.subr.bf16.mxu0 0
      %276 = vmatpush1.bf16.msra.mxu0 0
      %277 = vmatprep.subr.bf16.mxu0 0
      %278 = vmatpush1.bf16.msra.mxu0 0
      %279 = vmatprep.subr.bf16.mxu0 0
      %280 = vmatpush1.bf16.msra.mxu0 0
      %281 = vmatprep.subr.bf16.mxu0 0
      %282 = vmatpush1.bf16.msra.mxu0 0
      %283 = vmatprep.subr.bf16.mxu0 0
      %284 = vmatpush1.bf16.msra.mxu0 0
      %285 = vmatprep.subr.bf16.mxu0 0
      %286 = vmatpush1.bf16.msra.mxu0 0
      %287 = vmatprep.subr.bf16.mxu0 0
      %288 = vmatpush1.bf16.msra.mxu0 0
      %289 = vmatprep.subr.bf16.mxu0 0
      %290 = vmatpush1.bf16.msra.mxu0 0
      %291 = vmatprep.subr.bf16.mxu0 0
      %292 = vmatpush1.bf16.msra.mxu0 0
      %293 = vmatprep.subr.bf16.mxu0 0
      %294 = vmatpush1.bf16.msra.mxu0 0
      %295 = vmatprep.subr.bf16.mxu0 0
      %296 = vmatpush1.bf16.msra.mxu0 0
      %297 = vmatprep.subr.bf16.mxu0 0
      %298 = vmatpush1.bf16.msra.mxu0 0
      %299 = vmatprep.subr.bf16.mxu0 0
      %300 = vmatpush1.bf16.msra.mxu0 0
      %301 = vmatprep.subr.bf16.mxu0 0
      %302 = vmatpush1.bf16.msra.mxu0 0
      %303 = vmatprep.mubr.bf16.mxu0 0
      %304 = vmatmul.mubr.bf16.gmra.mrb[0].mxu0 %v265
      %v305 = vpop.f32.mrb[0].mxu0
      %v306 = vadd.f32 0.0, %v305
      %v307 = vpop.f32.mrb[0].mxu0
      %v308 = vpop.f32.mrb[0].mxu0
      %v309 = vpop.f32.mrb[0].mxu0
      %310 = vdwg.mxu0
      %v311 = vrcp.pop %v260
      %v312 = vmul.f32 %v306, %v311
      %v314 = vunpack.c.l.b16 %v188
      %v315 = vpack.c.b16 %v314, %v314
      %316 = vrot.lane.b32.xlu0 %v315, 120
      %v317 = vpop.permute.xlu0 %316
      %318 = vrot.lane.b32.xlu0 %v200, 88
      %v319 = vpop.permute.xlu0 %318
      %v321 = vsel %vm203, %v317, 0
      %v324 = vsel %vm203, %v319, 0
      %326 = vmatprep.subr.bf16.mxu0 0
      %327 = vmatpush1.bf16.xpose.msra.mxu0 %v324
      %328 = vmatprep.subr.bf16.mxu0 0
      %329 = vmatpush1.bf16.xpose.msra.mxu0 0
      %330 = vmatprep.subr.bf16.mxu0 0
      %331 = vmatpush1.bf16.xpose.msra.mxu0 0
      %332 = vmatprep.subr.bf16.mxu0 0
      %333 = vmatpush1.bf16.xpose.msra.mxu0 0
      %334 = vmatprep.subr.bf16.mxu0 0
      %335 = vmatpush1.bf16.xpose.msra.mxu0 0
      %336 = vmatprep.subr.bf16.mxu0 0
      %337 = vmatpush1.bf16.xpose.msra.mxu0 0
      %338 = vmatprep.subr.bf16.mxu0 0
      %339 = vmatpush1.bf16.xpose.msra.mxu0 0
      %340 = vmatprep.subr.bf16.mxu0 0
      %341 = vmatpush1.bf16.xpose.msra.mxu0 0
      %342 = vmatprep.subr.bf16.mxu0 0
      %343 = vmatpush1.bf16.xpose.msra.mxu0 0
      %344 = vmatprep.subr.bf16.mxu0 0
      %345 = vmatpush1.bf16.xpose.msra.mxu0 0
      %346 = vmatprep.subr.bf16.mxu0 0
      %347 = vmatpush1.bf16.xpose.msra.mxu0 0
      %348 = vmatprep.subr.bf16.mxu0 0
      %349 = vmatpush1.bf16.xpose.msra.mxu0 0
      %350 = vmatprep.subr.bf16.mxu0 0
      %351 = vmatpush1.bf16.xpose.msra.mxu0 0
      %352 = vmatprep.subr.bf16.mxu0 0
      %353 = vmatpush1.bf16.xpose.msra.mxu0 0
      %354 = vmatprep.subr.bf16.mxu0 0
      %355 = vmatpush1.bf16.xpose.msra.mxu0 0
      %356 = vmatprep.subr.bf16.mxu0 0
      %357 = vmatpush1.bf16.xpose.msra.mxu0 0
      %358 = vmatprep.mubr.bf16.mxu0 0
      %359 = vmatmul.mubr.bf16.gmra.mrb[0].mxu0 %v321
      %v360 = vpop.f32.mrb[0].mxu0
      %v361 = vadd.f32 0.0, %v360
      %v362 = vpop.f32.mrb[0].mxu0
      %v363 = vpop.f32.mrb[0].mxu0
      %v364 = vpop.f32.mrb[0].mxu0
      %365 = vdwg.mxu0
      %v366 = vmul.f32 %v361, 0.35355338
      %v367 = vsel %vm197, %v366, -1e+30
      %v368 = vsel %vm203, %v367, -inf
      %369 = vmax.xlane.f32.xlu0 %v368
      %v370 = vpop.xlane.xlu0 %369
      %v371 = vsub.f32 %v367, %v370
      %v372 = vmul.f32 %v371, 1.442695
      %v373 = vpow.pop %v372
      %v374 = vsel %vm203, %v373, 0.0
      %375 = vadd.xlane.f32.xlu0 %v374
      %v376 = vpop.xlane.xlu0 %375
      %v377 = vpack.c.bf16 %v373, %v373
      %378 = vrot.lane.b32.xlu0 %v200, 56
      %v379 = vpop.permute.xlu0 %378
      %v381 = vsel %vm203, %v377, 0
      %v384 = vsel %vm267, %v379, 0
      %386 = vmatprep.subr.bf16.mxu0 0
      %387 = vmatpush1.bf16.msra.mxu0 %v384
      %388 = vmatprep.subr.bf16.mxu0 0
      %389 = vmatpush1.bf16.msra.mxu0 0
      %390 = vmatprep.subr.bf16.mxu0 0
      %391 = vmatpush1.bf16.msra.mxu0 0
      %392 = vmatprep.subr.bf16.mxu0 0
      %393 = vmatpush1.bf16.msra.mxu0 0
      %394 = vmatprep.subr.bf16.mxu0 0
      %395 = vmatpush1.bf16.msra.mxu0 0
      %396 = vmatprep.subr.bf16.mxu0 0
      %397 = vmatpush1.bf16.msra.mxu0 0
      %398 = vmatprep.subr.bf16.mxu0 0
      %399 = vmatpush1.bf16.msra.mxu0 0
      %400 = vmatprep.subr.bf16.mxu0 0
      %401 = vmatpush1.bf16.msra.mxu0 0
      %402 = vmatprep.subr.bf16.mxu0 0
      %403 = vmatpush1.bf16.msra.mxu0 0
      %404 = vmatprep.subr.bf16.mxu0 0
      %405 = vmatpush1.bf16.msra.mxu0 0
      %406 = vmatprep.subr.bf16.mxu0 0
      %407 = vmatpush1.bf16.msra.mxu0 0
      %408 = vmatprep.subr.bf16.mxu0 0
      %409 = vmatpush1.bf16.msra.mxu0 0
      %410 = vmatprep.subr.bf16.mxu0 0
      %411 = vmatpush1.bf16.msra.mxu0 0
      %412 = vmatprep.subr.bf16.mxu0 0
      %413 = vmatpush1.bf16.msra.mxu0 0
      %414 = vmatprep.subr.bf16.mxu0 0
      %415 = vmatpush1.bf16.msra.mxu0 0
      %416 = vmatprep.subr.bf16.mxu0 0
      %417 = vmatpush1.bf16.msra.mxu0 0
      %418 = vmatprep.mubr.bf16.mxu0 0
      %419 = vmatmul.mubr.bf16.gmra.mrb[0].mxu0 %v381
      %v420 = vpop.f32.mrb[0].mxu0
      %v421 = vadd.f32 0.0, %v420
      %v422 = vpop.f32.mrb[0].mxu0
      %v423 = vpop.f32.mrb[0].mxu0
      %v424 = vpop.f32.mrb[0].mxu0
      %425 = vdwg.mxu0
      %v426 = vrcp.pop %v376
      %v427 = vmul.f32 %v421, %v426
      %428 = vrot.lane.b32.xlu0 %v315, 112
      %v429 = vpop.permute.xlu0 %428
      %430 = vrot.lane.b32.xlu0 %v200, 80
      %v431 = vpop.permute.xlu0 %430
      %v433 = vsel %vm203, %v429, 0
      %v436 = vsel %vm203, %v431, 0
      %438 = vmatprep.subr.bf16.mxu0 0
      %439 = vmatpush1.bf16.xpose.msra.mxu0 %v436
      %440 = vmatprep.subr.bf16.mxu0 0
      %441 = vmatpush1.bf16.xpose.msra.mxu0 0
      %442 = vmatprep.subr.bf16.mxu0 0
      %443 = vmatpush1.bf16.xpose.msra.mxu0 0
      %444 = vmatprep.subr.bf16.mxu0 0
      %445 = vmatpush1.bf16.xpose.msra.mxu0 0
      %446 = vmatprep.subr.bf16.mxu0 0
      %447 = vmatpush1.bf16.xpose.msra.mxu0 0
      %448 = vmatprep.subr.bf16.mxu0 0
      %449 = vmatpush1.bf16.xpose.msra.mxu0 0
      %450 = vmatprep.subr.bf16.mxu0 0
      %451 = vmatpush1.bf16.xpose.msra.mxu0 0
      %452 = vmatprep.subr.bf16.mxu0 0
      %453 = vmatpush1.bf16.xpose.msra.mxu0 0
      %454 = vmatprep.subr.bf16.mxu0 0
      %455 = vmatpush1.bf16.xpose.msra.mxu0 0
      %456 = vmatprep.subr.bf16.mxu0 0
      %457 = vmatpush1.bf16.xpose.msra.mxu0 0
      %458 = vmatprep.subr.bf16.mxu0 0
      %459 = vmatpush1.bf16.xpose.msra.mxu0 0
      %460 = vmatprep.subr.bf16.mxu0 0
      %461 = vmatpush1.bf16.xpose.msra.mxu0 0
      %462 = vmatprep.subr.bf16.mxu0 0
      %463 = vmatpush1.bf16.xpose.msra.mxu0 0
      %464 = vmatprep.subr.bf16.mxu0 0
      %465 = vmatpush1.bf16.xpose.msra.mxu0 0
      %466 = vmatprep.subr.bf16.mxu0 0
      %467 = vmatpush1.bf16.xpose.msra.mxu0 0
      %468 = vmatprep.subr.bf16.mxu0 0
      %469 = vmatpush1.bf16.xpose.msra.mxu0 0
      %470 = vmatprep.mubr.bf16.mxu0 0
      %471 = vmatmul.mubr.bf16.gmra.mrb[0].mxu0 %v433
      %v472 = vpop.f32.mrb[0].mxu0
      %v473 = vadd.f32 0.0, %v472
      %v474 = vpop.f32.mrb[0].mxu0
      %v475 = vpop.f32.mrb[0].mxu0
      %v476 = vpop.f32.mrb[0].mxu0
      %477 = vdwg.mxu0
      %v478 = vmul.f32 %v473, 0.35355338
      %v479 = vsel %vm197, %v478, -1e+30
      %v480 = vsel %vm203, %v479, -inf
      %481 = vmax.xlane.f32.xlu0 %v480
      %v482 = vpop.xlane.xlu0 %481
      %v483 = vsub.f32 %v479, %v482
      %v484 = vmul.f32 %v483, 1.442695
      %v485 = vpow.pop %v484
      %v486 = vsel %vm203, %v485, 0.0
      %487 = vadd.xlane.f32.xlu0 %v486
      %v488 = vpop.xlane.xlu0 %487
      %v489 = vpack.c.bf16 %v485, %v485
      %490 = vrot.lane.b32.xlu0 %v200, 48
      %v491 = vpop.permute.xlu0 %490
      %v493 = vsel %vm203, %v489, 0
      %v496 = vsel %vm267, %v491, 0
      %498 = vmatprep.subr.bf16.mxu0 0
      %499 = vmatpush1.bf16.msra.mxu0 %v496
      %500 = vmatprep.subr.bf16.mxu0 0
      %501 = vmatpush1.bf16.msra.mxu0 0
      %502 = vmatprep.subr.bf16.mxu0 0
      %503 = vmatpush1.bf16.msra.mxu0 0
      %504 = vmatprep.subr.bf16.mxu0 0
      %505 = vmatpush1.bf16.msra.mxu0 0
      %506 = vmatprep.subr.bf16.mxu0 0
      %507 = vmatpush1.bf16.msra.mxu0 0
      %508 = vmatprep.subr.bf16.mxu0 0
      %509 = vmatpush1.bf16.msra.mxu0 0
      %510 = vmatprep.subr.bf16.mxu0 0
      %511 = vmatpush1.bf16.msra.mxu0 0
      %512 = vmatprep.subr.bf16.mxu0 0
      %513 = vmatpush1.bf16.msra.mxu0 0
      %514 = vmatprep.subr.bf16.mxu0 0
      %515 = vmatpush1.bf16.msra.mxu0 0
      %516 = vmatprep.subr.bf16.mxu0 0
      %517 = vmatpush1.bf16.msra.mxu0 0
      %518 = vmatprep.subr.bf16.mxu0 0
      %519 = vmatpush1.bf16.msra.mxu0 0
      %520 = vmatprep.subr.bf16.mxu0 0
      %521 = vmatpush1.bf16.msra.mxu0 0
      %522 = vmatprep.subr.bf16.mxu0 0
      %523 = vmatpush1.bf16.msra.mxu0 0
      %524 = vmatprep.subr.bf16.mxu0 0
      %525 = vmatpush1.bf16.msra.mxu0 0
      %526 = vmatprep.subr.bf16.mxu0 0
      %527 = vmatpush1.bf16.msra.mxu0 0
      %528 = vmatprep.subr.bf16.mxu0 0
      %529 = vmatpush1.bf16.msra.mxu0 0
      %530 = vmatprep.mubr.bf16.mxu0 0
      %531 = vmatmul.mubr.bf16.gmra.mrb[0].mxu0 %v493
      %v532 = vpop.f32.mrb[0].mxu0
      %v533 = vadd.f32 0.0, %v532
      %v534 = vpop.f32.mrb[0].mxu0
      %v535 = vpop.f32.mrb[0].mxu0
      %v536 = vpop.f32.mrb[0].mxu0
      %537 = vdwg.mxu0
      %v538 = vrcp.pop %v488
      %v539 = vmul.f32 %v533, %v538
      %540 = vrot.lane.b32.xlu0 %v315, 104
      %v541 = vpop.permute.xlu0 %540
      %542 = vrot.lane.b32.xlu0 %v200, 72
      %v543 = vpop.permute.xlu0 %542
      %v545 = vsel %vm203, %v541, 0
      %v548 = vsel %vm203, %v543, 0
      %550 = vmatprep.subr.bf16.mxu0 0
      %551 = vmatpush1.bf16.xpose.msra.mxu0 %v548
      %552 = vmatprep.subr.bf16.mxu0 0
      %553 = vmatpush1.bf16.xpose.msra.mxu0 0
      %554 = vmatprep.subr.bf16.mxu0 0
      %555 = vmatpush1.bf16.xpose.msra.mxu0 0
      %556 = vmatprep.subr.bf16.mxu0 0
      %557 = vmatpush1.bf16.xpose.msra.mxu0 0
      %558 = vmatprep.subr.bf16.mxu0 0
      %559 = vmatpush1.bf16.xpose.msra.mxu0 0
      %560 = vmatprep.subr.bf16.mxu0 0
      %561 = vmatpush1.bf16.xpose.msra.mxu0 0
      %562 = vmatprep.subr.bf16.mxu0 0
      %563 = vmatpush1.bf16.xpose.msra.mxu0 0
      %564 = vmatprep.subr.bf16.mxu0 0
      %565 = vmatpush1.bf16.xpose.msra.mxu0 0
      %566 = vmatprep.subr.bf16.mxu0 0
      %567 = vmatpush1.bf16.xpose.msra.mxu0 0
      %568 = vmatprep.subr.bf16.mxu0 0
      %569 = vmatpush1.bf16.xpose.msra.mxu0 0
      %570 = vmatprep.subr.bf16.mxu0 0
      %571 = vmatpush1.bf16.xpose.msra.mxu0 0
      %572 = vmatprep.subr.bf16.mxu0 0
      %573 = vmatpush1.bf16.xpose.msra.mxu0 0
      %574 = vmatprep.subr.bf16.mxu0 0
      %575 = vmatpush1.bf16.xpose.msra.mxu0 0
      %576 = vmatprep.subr.bf16.mxu0 0
      %577 = vmatpush1.bf16.xpose.msra.mxu0 0
      %578 = vmatprep.subr.bf16.mxu0 0
      %579 = vmatpush1.bf16.xpose.msra.mxu0 0
      %580 = vmatprep.subr.bf16.mxu0 0
      %581 = vmatpush1.bf16.xpose.msra.mxu0 0
      %582 = vmatprep.mubr.bf16.mxu0 0
      %583 = vmatmul.mubr.bf16.gmra.mrb[0].mxu0 %v545
      %v584 = vpop.f32.mrb[0].mxu0
      %v585 = vadd.f32 0.0, %v584
      %v586 = vpop.f32.mrb[0].mxu0
      %v587 = vpop.f32.mrb[0].mxu0
      %v588 = vpop.f32.mrb[0].mxu0
      %589 = vdwg.mxu0
      %v590 = vmul.f32 %v585, 0.35355338
      %v591 = vsel %vm197, %v590, -1e+30
      %v592 = vsel %vm203, %v591, -inf
      %593 = vmax.xlane.f32.xlu0 %v592
      %v594 = vpop.xlane.xlu0 %593
      %v595 = vsub.f32 %v591, %v594
      %v596 = vmul.f32 %v595, 1.442695
      %v597 = vpow.pop %v596
      %v598 = vsel %vm203, %v597, 0.0
      %599 = vadd.xlane.f32.xlu0 %v598
      %v600 = vpop.xlane.xlu0 %599
      %v601 = vpack.c.bf16 %v597, %v597
      %602 = vrot.lane.b32.xlu0 %v200, 40
      %v603 = vpop.permute.xlu0 %602
      %v605 = vsel %vm203, %v601, 0
      %v608 = vsel %vm267, %v603, 0
      %610 = vmatprep.subr.bf16.mxu0 0
      %611 = vmatpush1.bf16.msra.mxu0 %v608
      %612 = vmatprep.subr.bf16.mxu0 0
      %613 = vmatpush1.bf16.msra.mxu0 0
      %614 = vmatprep.subr.bf16.mxu0 0
      %615 = vmatpush1.bf16.msra.mxu0 0
      %616 = vmatprep.subr.bf16.mxu0 0
      %617 = vmatpush1.bf16.msra.mxu0 0
      %618 = vmatprep.subr.bf16.mxu0 0
      %619 = vmatpush1.bf16.msra.mxu0 0
      %620 = vmatprep.subr.bf16.mxu0 0
      %621 = vmatpush1.bf16.msra.mxu0 0
      %622 = vmatprep.subr.bf16.mxu0 0
      %623 = vmatpush1.bf16.msra.mxu0 0
      %624 = vmatprep.subr.bf16.mxu0 0
      %625 = vmatpush1.bf16.msra.mxu0 0
      %626 = vmatprep.subr.bf16.mxu0 0
      %627 = vmatpush1.bf16.msra.mxu0 0
      %628 = vmatprep.subr.bf16.mxu0 0
      %629 = vmatpush1.bf16.msra.mxu0 0
      %630 = vmatprep.subr.bf16.mxu0 0
      %631 = vmatpush1.bf16.msra.mxu0 0
      %632 = vmatprep.subr.bf16.mxu0 0
      %633 = vmatpush1.bf16.msra.mxu0 0
      %634 = vmatprep.subr.bf16.mxu0 0
      %635 = vmatpush1.bf16.msra.mxu0 0
      %636 = vmatprep.subr.bf16.mxu0 0
      %637 = vmatpush1.bf16.msra.mxu0 0
      %638 = vmatprep.subr.bf16.mxu0 0
      %639 = vmatpush1.bf16.msra.mxu0 0
      %640 = vmatprep.subr.bf16.mxu0 0
      %641 = vmatpush1.bf16.msra.mxu0 0
      %642 = vmatprep.mubr.bf16.mxu0 0
      %643 = vmatmul.mubr.bf16.gmra.mrb[0].mxu0 %v605
      %v644 = vpop.f32.mrb[0].mxu0
      %v645 = vadd.f32 0.0, %v644
      %v646 = vpop.f32.mrb[0].mxu0
      %v647 = vpop.f32.mrb[0].mxu0
      %v648 = vpop.f32.mrb[0].mxu0
      %649 = vdwg.mxu0
      %v650 = vrcp.pop %v600
      %v651 = vmul.f32 %v645, %v650
      %653 = vrot.lane.b32.xlu0 %v427, 8
      %v654 = vpop.permute.xlu0 %653
      %657 = vrot.lane.b32.xlu0 %v539, 16
      %v658 = vpop.permute.xlu0 %657
      %661 = vrot.lane.b32.xlu0 %v651, 24
      %v662 = vpop.permute.xlu0 %661
      %v664 = vsel %vm203, %v312, %v654
      %vm665 = vcmask 130048
      %v666 = vsel %vm665, %v664, %v658
      %vm667 = vcmask 195584
      %v668 = vsel %vm667, %v666, %v662
      %v669 = vpack.c.bf16 %v668, %v668
      %vm670 = vcmask 257024
      %671 = vst.msk [vmem:[%s186] sm:$0xf] %vm670, %v669
      %p672 = scmp.lt.s32.totalorder %s17, 1
      %s673 = scalar_select %p672, %s17, 1
      %p674 = scmp.lt.s32.totalorder %s18, 0
      %s675 = scalar_select %p674, %s18, 0
      %s676 = sadd.s32 %s675, %s673
      %s677 = smul.addr %s676, 4
      %s678 = scalar_lea.vmem %s2, %s677
      // Predicated region
      $region29: #{gpt2_forward.12} parent=27 // pred_check
        %p679 = pneg %p99
      $region30: #{gpt2_forward.12} parent=27 // pred_check_branch
        %681 = sbr.rel (%p679) target = $region32
      $region31: #{gpt2_forward.12} parent=27 // pred_region
        _
      $region32: #{gpt2_forward.12} parent=27 // pred_fallthru
        _
    $region28: #{gpt2_forward.12} parent=5 // pred_fallthru
      _
    %p682 = scmp.le.s32.totalorder 2, %s8
    // Predicated region
    $region33: #{gpt2_forward.12} parent=5 // pred_check
      %p683 = pneg %p682
    $region34: #{gpt2_forward.12} parent=5 // pred_check_branch
      %685 = sbr.rel (%p683) target = $region36
    $region35: #{gpt2_forward.12} parent=5 // pred_region
      %s686 = ssub.s32 %s8, 2
      // Predicated region
      $region37: #{gpt2_forward.12} parent=35 // pred_check
        %p687 = pneg %p105
      $region38: #{gpt2_forward.12} parent=35 // pred_check_branch
        %689 = sbr.rel (%p687) target = $region40
      $region39: #{gpt2_forward.12} parent=35 // pred_region
        %p690 = scmp.lt.s32.totalorder %s19, 1
        %s691 = scalar_select %p690, %s19, 1
        %p692 = scmp.lt.s32.totalorder %s20, 0
        %s693 = scalar_select %p692, %s20, 0
        %s694 = sadd.s32 %s693, %s691
        %s695 = smul.addr %s694, 4
        %s696 = scalar_lea.vmem %s2, %s695
      $region40: #{gpt2_forward.12} parent=35 // pred_fallthru
        _
    $region36: #{gpt2_forward.12} parent=5 // pred_fallthru
      _
  $region6: #{gpt2_forward.12} parent=0 // loop_footer
    %s12 = sadd.s32 1, %s8
  $region7: #{gpt2_forward.12} parent=0 // loop_footer_branch
    %7 = sbr.rel target = $region3
  $region8: #{gpt2_forward.12} parent=0 // loop_exit
    _

// kernel: gpt2_forward.14
$region0: #{gpt2_forward.14}
  #allocation0 [shape = 'u32[]', space=smem, size = 0x4, offset = 0x4, fixed_abs, tag = 'smem constant byte address 0x4 - core index']
  #allocation1 [shape = 'u32[144,128]{1,0:T(1,128)}', space=vmem, size = 0x12000, scoped, tag = 'internal scratch']
  #allocation2 [shape = 'f32[16,128]{1,0:T(8,128)}', space=vmem, size = 0x2000, scoped, tag = 'scratch operand']
  %s0 = inlined_call_operand.vmem [shape: f32[16,32], index: 0, kind: input, shape index: {}]
  %s1 = inlined_call_operand.vmem [shape: bf16[32,128], index: 1, kind: input, shape index: {}]
  %s2 = inlined_call_operand.vmem [shape: f32[1,128], index: 2, kind: input, shape index: {}]
  %s3 = inlined_call_operand.vmem [shape: f32[1,32], index: 3, kind: input, shape index: {}]
  %s4 = inlined_call_operand.vmem [shape: f32[1,32], index: 4, kind: input, shape index: {}]
  %s5 = inlined_call_operand.vmem [shape: bf16[16,128], index: 5, kind: output, shape index: {}]
  %s6 = sld [smem:[#allocation0]]
  $region38: #{gpt2_forward.14} parent=0
    _
  %s8 = ssub.s32 1, %s6
  %s9 = scalar_select 0, %s8, %s6
  // Predicated region
  $region2: #{gpt2_forward.14} parent=0 // pred_check
    _
  $region3: #{gpt2_forward.14} parent=0 // pred_check_branch
    %11 = sbr.rel (0) target = $region5
  $region4: #{gpt2_forward.14} parent=0 // pred_region
    _
  $region5: #{gpt2_forward.14} parent=0 // pred_fallthru
    _
  // Predicated region
  $region6: #{gpt2_forward.14} parent=0 // pred_check
    _
  $region7: #{gpt2_forward.14} parent=0 // pred_check_branch
    %13 = sbr.rel (0) target = $region9
  $region8: #{gpt2_forward.14} parent=0 // pred_region
    _
  $region9: #{gpt2_forward.14} parent=0 // pred_fallthru
    _
  // Predicated region
  $region10: #{gpt2_forward.14} parent=0 // pred_check
    _
  $region11: #{gpt2_forward.14} parent=0 // pred_check_branch
    %15 = sbr.rel (0) target = $region13
  $region12: #{gpt2_forward.14} parent=0 // pred_region
    _
  $region13: #{gpt2_forward.14} parent=0 // pred_fallthru
    _
  // Predicated region
  $region14: #{gpt2_forward.14} parent=0 // pred_check
    _
  $region15: #{gpt2_forward.14} parent=0 // pred_check_branch
    %17 = sbr.rel (0) target = $region17
  $region16: #{gpt2_forward.14} parent=0 // pred_region
    _
  $region17: #{gpt2_forward.14} parent=0 // pred_fallthru
    _
  // Predicated region
  $region18: #{gpt2_forward.14} parent=0 // pred_check
    _
  $region19: #{gpt2_forward.14} parent=0 // pred_check_branch
    %19 = sbr.rel (0) target = $region21
  $region20: #{gpt2_forward.14} parent=0 // pred_region
    _
  $region21: #{gpt2_forward.14} parent=0 // pred_fallthru
    _
  %p21 = scmp.eq.s32.totalorder 0, 0
  // Predicated region
  $region22: #{gpt2_forward.14} parent=0 // pred_check
    %p22 = pneg %p21
  $region23: #{gpt2_forward.14} parent=0 // pred_check_branch
    %24 = sbr.rel (%p22) target = $region25
  $region24: #{gpt2_forward.14} parent=0 // pred_region
    %25 = vst [vmem:[#allocation2] sm:$0xff] 0.0
    %26 = vst [vmem:[#allocation2 + $0x8] sm:$0xff] 0.0
  $region25: #{gpt2_forward.14} parent=0 // pred_fallthru
    _
  %v27 = vld [vmem:[%s0] sm:$0xff]
  %v28 = vld [vmem:[%s0 + $0x8] sm:$0xff]
  %vm29 = vcmask 261120
  %v30 = vsel %vm29, %v27, 0.0
  %31 = vadd.xlane.f32.xlu0 %v30
  %v32 = vpop.xlane.xlu0 %31
  %v33 = vsel %vm29, %v28, 0.0
  %34 = vadd.xlane.f32.xlu0 %v33
  %v35 = vpop.xlane.xlu0 %34
  %v36 = vrcp.pop 32.0
  %v37 = vmul.f32 %v32, %v36
  %v38 = vmul.f32 %v35, %v36
  %v39 = vsub.f32 %v27, %v37
  %v40 = vsub.f32 %v28, %v38
  %v41 = vmul.f32 %v39, %v39
  %v42 = vmul.f32 %v40, %v40
  %v43 = vsel %vm29, %v41, 0.0
  %44 = vadd.xlane.f32.xlu0 %v43
  %v45 = vpop.xlane.xlu0 %44
  %v46 = vsel %vm29, %v42, 0.0
  %47 = vadd.xlane.f32.xlu0 %v46
  %v48 = vpop.xlane.xlu0 %47
  %v49 = vmul.f32 %v45, %v36
  %v50 = vmul.f32 %v48, %v36
  %v51 = vadd.f32 %v49, 1e-05
  %v52 = vadd.f32 %v50, 1e-05
  %v53 = vrsqrt.pop %v51
  %v54 = vrsqrt.pop %v52
  %v55 = vmul.f32 %v39, %v53
  %v56 = vmul.f32 %v40, %v54
  %v57 = vld [vmem:[%s3] sm:$0x1]
  %v59 = vlaneseq
  %v60 = vshrl.u32 %v59, 7
  %v61 = vsub.s32 0, %v60
  %v62 = vrot.slane %v57, %v61
  %v64 = vmul.f32 %v55, %v62
  %v65 = vmul.f32 %v56, %v62
  %v66 = vld [vmem:[%s4] sm:$0x1]
  %v68 = vlaneseq
  %v69 = vshrl.u32 %v68, 7
  %v70 = vsub.s32 0, %v69
  %v71 = vrot.slane %v66, %v70
  %v73 = vadd.f32 %v64, %v71
  %v74 = vadd.f32 %v65, %v71
  %v75 = vpack.c.bf16 %v74, %v73
  %v76 = vld [vmem:[%s1] sm:$0xf]
  %v77 = vld [vmem:[%s1 + $0x4] sm:$0xf]
  %v78 = vld [vmem:[%s1 + $0x8] sm:$0xf]
  %v79 = vld [vmem:[%s1 + $0xc] sm:$0xf]
  %v80 = vld [vmem:[#allocation2] sm:$0xff]
  %v81 = vld [vmem:[#allocation2 + $0x8] sm:$0xff]
  %v86 = vunpack.c.l.b16 %v76
  %v87 = vunpack.c.l.b16 %v77
  %v88 = vunpack.c.l.b16 %v78
  %v89 = vunpack.c.l.b16 %v79
  %v90 = vpack.c.b16 %v87, %v86
  %v91 = vpack.c.b16 %v89, %v88
  %v95 = vsel %vm29, %v75, 0
  %97 = vmatprep.subr.bf16.mxu0 0
  %98 = vmatpush1.bf16.msra.mxu0 %v90
  %99 = vmatprep.subr.bf16.mxu0 0
  %100 = vmatpush1.bf16.msra.mxu0 %v91
  %101 = vmatprep.subr.bf16.mxu0 0
  %102 = vmatpush1.bf16.msra.mxu0 0
  %103 = vmatprep.subr.bf16.mxu0 0
  %104 = vmatpush1.bf16.msra.mxu0 0
  %105 = vmatprep.subr.bf16.mxu0 0
  %106 = vmatpush1.bf16.msra.mxu0 0
  %107 = vmatprep.subr.bf16.mxu0 0
  %108 = vmatpush1.bf16.msra.mxu0 0
  %109 = vmatprep.subr.bf16.mxu0 0
  %110 = vmatpush1.bf16.msra.mxu0 0
  %111 = vmatprep.subr.bf16.mxu0 0
  %112 = vmatpush1.bf16.msra.mxu0 0
  %113 = vmatprep.subr.bf16.mxu0 0
  %114 = vmatpush1.bf16.msra.mxu0 0
  %115 = vmatprep.subr.bf16.mxu0 0
  %116 = vmatpush1.bf16.msra.mxu0 0
  %117 = vmatprep.subr.bf16.mxu0 0
  %118 = vmatpush1.bf16.msra.mxu0 0
  %119 = vmatprep.subr.bf16.mxu0 0
  %120 = vmatpush1.bf16.msra.mxu0 0
  %121 = vmatprep.subr.bf16.mxu0 0
  %122 = vmatpush1.bf16.msra.mxu0 0
  %123 = vmatprep.subr.bf16.mxu0 0
  %124 = vmatpush1.bf16.msra.mxu0 0
  %125 = vmatprep.subr.bf16.mxu0 0
  %126 = vmatpush1.bf16.msra.mxu0 0
  %127 = vmatprep.subr.bf16.mxu0 0
  %128 = vmatpush1.bf16.msra.mxu0 0
  %129 = vmatprep.mubr.bf16.mxu0 0
  %130 = vmatmul.mubr.bf16.gmra.mrb[0].mxu0 %v95
  %v131 = vpop.f32.mrb[0].mxu0
  %v132 = vadd.f32 0.0, %v131
  %v133 = vpop.f32.mrb[0].mxu0
  %v134 = vpop.f32.mrb[0].mxu0
  %v135 = vadd.f32 0.0, %v134
  %v136 = vpop.f32.mrb[0].mxu0
  %137 = vdwg.mxu0
  %v138 = vadd.f32 %v80, %v132
  %v139 = vadd.f32 %v81, %v135
  %140 = vst [vmem:[#allocation2] sm:$0xff] %v138
  %141 = vst [vmem:[#allocation2 + $0x8] sm:$0xff] %v139
  // Predicated region
  $region26: #{gpt2_forward.14} parent=0 // pred_check
    %p142 = pneg %p21
  $region27: #{gpt2_forward.14} parent=0 // pred_check_branch
    %144 = sbr.rel (%p142) target = $region29
  $region28: #{gpt2_forward.14} parent=0 // pred_region
    %v145 = vld [vmem:[#allocation2] sm:$0xff]
    %v146 = vld [vmem:[#allocation2 + $0x8] sm:$0xff]
    %v147 = vld [vmem:[%s2] sm:$0x1]
    %v149 = vlaneseq
    %v150 = vshrl.u32 %v149, 7
    %v151 = vsub.s32 0, %v150
    %v152 = vrot.slane %v147, %v151
    %v154 = vadd.f32 %v145, %v152
    %v155 = vadd.f32 %v146, %v152
    %v156 = vmul.f32 %v154, 0.5
    %v157 = vmul.f32 %v155, 0.5
    %v158 = vmul.f32 %v154, %v154
    %v159 = vmul.f32 %v155, %v155
    %v160 = vmul.f32 %v158, %v154
    %v161 = vmul.f32 %v159, %v155
    %v162 = vmul.f32 %v160, 0.044715
    %v163 = vmul.f32 %v161, 0.044715
    %v164 = vadd.f32 %v154, %v162
    %v165 = vadd.f32 %v155, %v163
    %v166 = vmul.f32 %v164, 0.7978846
    %v167 = vmul.f32 %v165, 0.7978846
    %v168 = vtanh.pop %v166
    %v169 = vtanh.pop %v167
    %v170 = vadd.f32 %v168, 1.0
    %v171 = vadd.f32 %v169, 1.0
    %v172 = vmul.f32 %v156, %v170
    %v173 = vmul.f32 %v157, %v171
    %v174 = vpack.c.bf16 %v173, %v172
    %v176 = vunpack.c.l.b16 %v174
    %v177 = vunpack.c.h.b16 %v174
    %v178 = vpack.c.b16 %v176, %v176
    %v179 = vpack.c.b16 %v177, %v177
    %182 = vst [vmem:[%s5] sm:$0xf] %v178
    %183 = vst [vmem:[%s5 + $0x4] sm:$0xf] %v179
  $region29: #{gpt2_forward.14} parent=0 // pred_fallthru
    _
  // Predicated region
  $region30: #{gpt2_forward.14} parent=0 // pred_check
    _
  $region31: #{gpt2_forward.14} parent=0 // pred_check_branch
    %185 = sbr.rel (0) target = $region33
  $region32: #{gpt2_forward.14} parent=0 // pred_region
    _
  $region33: #{gpt2_forward.14} parent=0 // pred_fallthru
    _
  // Predicated region
  $region34: #{gpt2_forward.14} parent=0 // pred_check
    _
  $region35: #{gpt2_forward.14} parent=0 // pred_check_branch
    %187 = sbr.rel (0) target = $region37
  $region36: #{gpt2_forward.14} parent=0 // pred_region
    _
  $region37: #{gpt2_forward.14} parent=0 // pred_fallthru
    _

// kernel: gpt2_forward.15
$region0: #{gpt2_forward.15}
  #allocation0 [shape = 'u32[]', space=smem, size = 0x4, offset = 0x4, fixed_abs, tag = 'smem constant byte address 0x4 - core index']
  #allocation1 [shape = 'u32[144,128]{1,0:T(1,128)}', space=vmem, size = 0x12000, scoped, tag = 'internal scratch']
  #allocation2 [shape = 'f32[16,32]{1,0:T(8,128)}', space=vmem, size = 0x2000, scoped, tag = 'scratch operand']
  %s0 = inlined_call_operand.vmem [shape: bf16[16,128], index: 0, kind: input, shape index: {}]
  %s1 = inlined_call_operand.vmem [shape: bf16[128,32], index: 1, kind: input, shape index: {}]
  %s2 = inlined_call_operand.vmem [shape: f32[1,32], index: 2, kind: input, shape index: {}]
  %s3 = inlined_call_operand.vmem [shape: f32[16,32], index: 3, kind: input, shape index: {}]
  %s4 = inlined_call_operand.vmem [shape: f32[16,32], index: 4, kind: output, shape index: {}]
  %s5 = sld [smem:[#allocation0]]
  $region34: #{gpt2_forward.15} parent=0
    _
  %s7 = ssub.s32 1, %s5
  %s8 = scalar_select 0, %s7, %s5
  // Predicated region
  $region2: #{gpt2_forward.15} parent=0 // pred_check
    _
  $region3: #{gpt2_forward.15} parent=0 // pred_check_branch
    %10 = sbr.rel (0) target = $region5
  $region4: #{gpt2_forward.15} parent=0 // pred_region
    _
  $region5: #{gpt2_forward.15} parent=0 // pred_fallthru
    _
  // Predicated region
  $region6: #{gpt2_forward.15} parent=0 // pred_check
    _
  $region7: #{gpt2_forward.15} parent=0 // pred_check_branch
    %12 = sbr.rel (0) target = $region9
  $region8: #{gpt2_forward.15} parent=0 // pred_region
    _
  $region9: #{gpt2_forward.15} parent=0 // pred_fallthru
    _
  // Predicated region
  $region10: #{gpt2_forward.15} parent=0 // pred_check
    _
  $region11: #{gpt2_forward.15} parent=0 // pred_check_branch
    %14 = sbr.rel (0) target = $region13
  $region12: #{gpt2_forward.15} parent=0 // pred_region
    _
  $region13: #{gpt2_forward.15} parent=0 // pred_fallthru
    _
  // Predicated region
  $region14: #{gpt2_forward.15} parent=0 // pred_check
    _
  $region15: #{gpt2_forward.15} parent=0 // pred_check_branch
    %16 = sbr.rel (0) target = $region17
  $region16: #{gpt2_forward.15} parent=0 // pred_region
    _
  $region17: #{gpt2_forward.15} parent=0 // pred_fallthru
    _
  %p18 = scmp.eq.s32.totalorder 0, 0
  // Predicated region
  $region18: #{gpt2_forward.15} parent=0 // pred_check
    %p19 = pneg %p18
  $region19: #{gpt2_forward.15} parent=0 // pred_check_branch
    %21 = sbr.rel (%p19) target = $region21
  $region20: #{gpt2_forward.15} parent=0 // pred_region
    %vm22 = vcmask 261120
    %23 = vst.msk [vmem:[#allocation2] sm:$0xff] %vm22, 0.0
    %24 = vst.msk [vmem:[#allocation2 + $0x8] sm:$0xff] %vm22, 0.0
  $region21: #{gpt2_forward.15} parent=0 // pred_fallthru
    _
  %v25 = vld [vmem:[%s0] sm:$0xf]
  %v26 = vld [vmem:[%s0 + $0x4] sm:$0xf]
  %v27 = vld [vmem:[%s1] sm:$0xf]
  %v28 = vld [vmem:[%s1 + $0x4] sm:$0xf]
  %v29 = vld [vmem:[%s1 + $0x8] sm:$0xf]
  %v30 = vld [vmem:[%s1 + $0xc] sm:$0xf]
  %v31 = vld [vmem:[%s1 + $0x10] sm:$0xf]
  %v32 = vld [vmem:[%s1 + $0x14] sm:$0xf]
  %v33 = vld [vmem:[%s1 + $0x18] sm:$0xf]
  %v34 = vld [vmem:[%s1 + $0x1c] sm:$0xf]
  %v35 = vld [vmem:[%s1 + $0x20] sm:$0xf]
  %v36 = vld [vmem:[%s1 + $0x24] sm:$0xf]
  %v37 = vld [vmem:[%s1 + $0x28] sm:$0xf]
  %v38 = vld [vmem:[%s1 + $0x2c] sm:$0xf]
  %v39 = vld [vmem:[%s1 + $0x30] sm:$0xf]
  %v40 = vld [vmem:[%s1 + $0x34] sm:$0xf]
  %v41 = vld [vmem:[%s1 + $0x38] sm:$0xf]
  %v42 = vld [vmem:[%s1 + $0x3c] sm:$0xf]
  %v43 = vld [vmem:[#allocation2] sm:$0xff]
  %v44 = vld [vmem:[#allocation2 + $0x8] sm:$0xff]
  %v47 = vunpack.c.l.b16 %v25
  %v48 = vunpack.c.l.b16 %v26
  %v49 = vpack.c.b16 %v48, %v47
  %v67 = vunpack.c.l.b16 %v27
  %v68 = vunpack.c.l.b16 %v28
  %v69 = vunpack.c.l.b16 %v29
  %v70 = vunpack.c.l.b16 %v30
  %v71 = vunpack.c.l.b16 %v31
  %v72 = vunpack.c.l.b16 %v32
  %v73 = vunpack.c.l.b16 %v33
  %v74 = vunpack.c.l.b16 %v34
  %v75 = vunpack.c.l.b16 %v35
  %v76 = vunpack.c.l.b16 %v36
  %v77 = vunpack.c.l.b16 %v37
  %v78 = vunpack.c.l.b16 %v38
  %v79 = vunpack.c.l.b16 %v39
  %v80 = vunpack.c.l.b16 %v40
  %v81 = vunpack.c.l.b16 %v41
  %v82 = vunpack.c.l.b16 %v42
  %v83 = vpack.c.b16 %v68, %v67
  %v84 = vpack.c.b16 %v70, %v69
  %v85 = vpack.c.b16 %v72, %v71
  %v86 = vpack.c.b16 %v74, %v73
  %v87 = vpack.c.b16 %v76, %v75
  %v88 = vpack.c.b16 %v78, %v77
  %v89 = vpack.c.b16 %v80, %v79
  %v90 = vpack.c.b16 %v82, %v81
  %99 = vmatprep.subr.bf16.mxu0 0
  %100 = vmatpush1.bf16.msra.mxu0 %v83
  %101 = vmatprep.subr.bf16.mxu0 0
  %102 = vmatpush1.bf16.msra.mxu0 %v84
  %103 = vmatprep.subr.bf16.mxu0 0
  %104 = vmatpush1.bf16.msra.mxu0 %v85
  %105 = vmatprep.subr.bf16.mxu0 0
  %106 = vmatpush1.bf16.msra.mxu0 %v86
  %107 = vmatprep.subr.bf16.mxu0 0
  %108 = vmatpush1.bf16.msra.mxu0 %v87
  %109 = vmatprep.subr.bf16.mxu0 0
  %110 = vmatpush1.bf16.msra.mxu0 %v88
  %111 = vmatprep.subr.bf16.mxu0 0
  %112 = vmatpush1.bf16.msra.mxu0 %v89
  %113 = vmatprep.subr.bf16.mxu0 0
  %114 = vmatpush1.bf16.msra.mxu0 %v90
  %115 = vmatprep.subr.bf16.mxu0 0
  %116 = vmatpush1.bf16.msra.mxu0 0
  %117 = vmatprep.subr.bf16.mxu0 0
  %118 = vmatpush1.bf16.msra.mxu0 0
  %119 = vmatprep.subr.bf16.mxu0 0
  %120 = vmatpush1.bf16.msra.mxu0 0
  %121 = vmatprep.subr.bf16.mxu0 0
  %122 = vmatpush1.bf16.msra.mxu0 0
  %123 = vmatprep.subr.bf16.mxu0 0
  %124 = vmatpush1.bf16.msra.mxu0 0
  %125 = vmatprep.subr.bf16.mxu0 0
  %126 = vmatpush1.bf16.msra.mxu0 0
  %127 = vmatprep.subr.bf16.mxu0 0
  %128 = vmatpush1.bf16.msra.mxu0 0
  %129 = vmatprep.subr.bf16.mxu0 0
  %130 = vmatpush1.bf16.msra.mxu0 0
  %131 = vmatprep.mubr.bf16.mxu0 0
  %132 = vmatmul.mubr.bf16.gmra.mrb[0].mxu0 %v49
  %v133 = vpop.f32.mrb[0].mxu0
  %v134 = vadd.f32 0.0, %v133
  %v135 = vpop.f32.mrb[0].mxu0
  %v136 = vpop.f32.mrb[0].mxu0
  %v137 = vadd.f32 0.0, %v136
  %v138 = vpop.f32.mrb[0].mxu0
  %139 = vdwg.mxu0
  %v140 = vadd.f32 %v43, %v134
  %v141 = vadd.f32 %v44, %v137
  %vm142 = vcmask 261120
  %143 = vst.msk [vmem:[#allocation2] sm:$0xff] %vm142, %v140
  %144 = vst.msk [vmem:[#allocation2 + $0x8] sm:$0xff] %vm142, %v141
  // Predicated region
  $region22: #{gpt2_forward.15} parent=0 // pred_check
    %p145 = pneg %p18
  $region23: #{gpt2_forward.15} parent=0 // pred_check_branch
    %147 = sbr.rel (%p145) target = $region25
  $region24: #{gpt2_forward.15} parent=0 // pred_region
    %v148 = vld [vmem:[#allocation2] sm:$0xff]
    %v149 = vld [vmem:[#allocation2 + $0x8] sm:$0xff]
    %v150 = vld [vmem:[%s2] sm:$0x1]
    %v152 = vlaneseq
    %v153 = vshrl.u32 %v152, 7
    %v154 = vsub.s32 0, %v153
    %v155 = vrot.slane %v150, %v154
    %v157 = vadd.f32 %v148, %v155
    %v158 = vadd.f32 %v149, %v155
    %v159 = vld [vmem:[%s3] sm:$0xff]
    %v160 = vld [vmem:[%s3 + $0x8] sm:$0xff]
    %v161 = vadd.f32 %v157, %v159
    %v162 = vadd.f32 %v158, %v160
    %163 = vst.msk [vmem:[%s4] sm:$0xff] %vm142, %v161
    %164 = vst.msk [vmem:[%s4 + $0x8] sm:$0xff] %vm142, %v162
  $region25: #{gpt2_forward.15} parent=0 // pred_fallthru
    _
  // Predicated region
  $region26: #{gpt2_forward.15} parent=0 // pred_check
    _
  $region27: #{gpt2_forward.15} parent=0 // pred_check_branch
    %166 = sbr.rel (0) target = $region29
  $region28: #{gpt2_forward.15} parent=0 // pred_region
    _
  $region29: #{gpt2_forward.15} parent=0 // pred_fallthru
    _
  // Predicated region
  $region30: #{gpt2_forward.15} parent=0 // pred_check
    _
  $region31: #{gpt2_forward.15} parent=0 // pred_check_branch
    %168 = sbr.rel (0) target = $region33
  $region32: #{gpt2_forward.15} parent=0 // pred_region
    _
  $region33: #{gpt2_forward.15} parent=0 // pred_fallthru
    _

// kernel: gpt2_forward.21
$region0: #{gpt2_forward.21}
  #allocation0 [shape = 'u32[]', space=smem, size = 0x4, offset = 0x4, fixed_abs, tag = 'smem constant byte address 0x4 - core index']
  #allocation1 [shape = 'u32[144,128]{1,0:T(1,128)}', space=vmem, size = 0x12000, scoped, tag = 'internal scratch']
  #allocation2 [shape = 'f32[16,256]{1,0:T(8,128)}', space=vmem, size = 0x4000, scoped, tag = 'scratch operand']
  %s0 = inlined_call_operand.vmem [shape: f32[16,32], index: 0, kind: input, shape index: {}]
  %s1 = inlined_call_operand.vmem [shape: bf16[256,32], index: 1, kind: input, shape index: {}]
  %s2 = inlined_call_operand.vmem [shape: f32[1,256], index: 2, kind: input, shape index: {}]
  %s3 = inlined_call_operand.vmem [shape: f32[1,32], index: 3, kind: input, shape index: {}]
  %s4 = inlined_call_operand.vmem [shape: f32[1,32], index: 4, kind: input, shape index: {}]
  %s5 = inlined_call_operand.hbm [shape: f32[16,256], index: 5, kind: output, shape index: {}]
  %s6 = sld [smem:[#allocation0]]
  $region38: #{gpt2_forward.21} parent=0
    _
  %s8 = ssub.s32 1, %s6
  %s9 = scalar_select 0, %s8, %s6
  $region1: #{gpt2_forward.21} parent=0
    #allocation3 [shape = 'u8[16384]{0}', space=vmem, size = 0x4000, scoped, tag = 'output window, operand 0, single buffered']
    #allocation4 [shape = 's32[1]{0}', space=sflag, size = 0x4, scoped, tag = 'scoped memory for gpt2_forward.21']
    %10 = vsyncpa [#allocation4], 0
    // Predicated region
    $region2: #{gpt2_forward.21} parent=1 // pred_check
      _
    $region3: #{gpt2_forward.21} parent=1 // pred_check_branch
      %12 = sbr.rel (0) target = $region5
    $region4: #{gpt2_forward.21} parent=1 // pred_region
      _
    $region5: #{gpt2_forward.21} parent=1 // pred_fallthru
      _
    // Predicated region
    $region6: #{gpt2_forward.21} parent=1 // pred_check
      _
    $region7: #{gpt2_forward.21} parent=1 // pred_check_branch
      %14 = sbr.rel (0) target = $region9
    $region8: #{gpt2_forward.21} parent=1 // pred_region
      _
    $region9: #{gpt2_forward.21} parent=1 // pred_fallthru
      _
    // Predicated region
    $region10: #{gpt2_forward.21} parent=1 // pred_check
      _
    $region11: #{gpt2_forward.21} parent=1 // pred_check_branch
      %16 = sbr.rel (0) target = $region13
    $region12: #{gpt2_forward.21} parent=1 // pred_region
      _
    $region13: #{gpt2_forward.21} parent=1 // pred_fallthru
      _
    // Predicated region
    $region14: #{gpt2_forward.21} parent=1 // pred_check
      _
    $region15: #{gpt2_forward.21} parent=1 // pred_check_branch
      %18 = sbr.rel (0) target = $region17
    $region16: #{gpt2_forward.21} parent=1 // pred_region
      _
    $region17: #{gpt2_forward.21} parent=1 // pred_fallthru
      _
    // Predicated region
    $region18: #{gpt2_forward.21} parent=1 // pred_check
      _
    $region19: #{gpt2_forward.21} parent=1 // pred_check_branch
      %20 = sbr.rel (0) target = $region21
    $region20: #{gpt2_forward.21} parent=1 // pred_region
      _
    $region21: #{gpt2_forward.21} parent=1 // pred_fallthru
      _
    %p22 = scmp.eq.s32.totalorder 0, 0
    // Predicated region
    $region22: #{gpt2_forward.21} parent=1 // pred_check
      %p23 = pneg %p22
    $region23: #{gpt2_forward.21} parent=1 // pred_check_branch
      %25 = sbr.rel (%p23) target = $region25
    $region24: #{gpt2_forward.21} parent=1 // pred_region
      %26 = vst [vmem:[#allocation2] sm:$0xff] 0.0
      %27 = vst [vmem:[#allocation2 + $0x8] sm:$0xff] 0.0
      %28 = vst [vmem:[#allocation2 + $0x10] sm:$0xff] 0.0
      %29 = vst [vmem:[#allocation2 + $0x18] sm:$0xff] 0.0
    $region25: #{gpt2_forward.21} parent=1 // pred_fallthru
      _
    %v30 = vld [vmem:[%s0] sm:$0xff]
    %v31 = vld [vmem:[%s0 + $0x8] sm:$0xff]
    %vm32 = vcmask 261120
    %v33 = vsel %vm32, %v30, 0.0
    %34 = vadd.xlane.f32.xlu0 %v33
    %v35 = vpop.xlane.xlu0 %34
    %v36 = vsel %vm32, %v31, 0.0
    %37 = vadd.xlane.f32.xlu0 %v36
    %v38 = vpop.xlane.xlu0 %37
    %v39 = vrcp.pop 32.0
    %v40 = vmul.f32 %v35, %v39
    %v41 = vmul.f32 %v38, %v39
    %v42 = vsub.f32 %v30, %v40
    %v43 = vsub.f32 %v31, %v41
    %v44 = vmul.f32 %v42, %v42
    %v45 = vmul.f32 %v43, %v43
    %v46 = vsel %vm32, %v44, 0.0
    %47 = vadd.xlane.f32.xlu0 %v46
    %v48 = vpop.xlane.xlu0 %47
    %v49 = vsel %vm32, %v45, 0.0
    %50 = vadd.xlane.f32.xlu0 %v49
    %v51 = vpop.xlane.xlu0 %50
    %v52 = vmul.f32 %v48, %v39
    %v53 = vmul.f32 %v51, %v39
    %v54 = vadd.f32 %v52, 1e-05
    %v55 = vadd.f32 %v53, 1e-05
    %v56 = vrsqrt.pop %v54
    %v57 = vrsqrt.pop %v55
    %v58 = vmul.f32 %v42, %v56
    %v59 = vmul.f32 %v43, %v57
    %v60 = vld [vmem:[%s3] sm:$0x1]
    %v62 = vlaneseq
    %v63 = vshrl.u32 %v62, 7
    %v64 = vsub.s32 0, %v63
    %v65 = vrot.slane %v60, %v64
    %v67 = vmul.f32 %v58, %v65
    %v68 = vmul.f32 %v59, %v65
    %v69 = vld [vmem:[%s4] sm:$0x1]
    %v71 = vlaneseq
    %v72 = vshrl.u32 %v71, 7
    %v73 = vsub.s32 0, %v72
    %v74 = vrot.slane %v69, %v73
    %v76 = vadd.f32 %v67, %v74
    %v77 = vadd.f32 %v68, %v74
    %v78 = vpack.c.bf16 %v77, %v76
    %v79 = vld [vmem:[%s1] sm:$0xf]
    %v80 = vld [vmem:[%s1 + $0x4] sm:$0xf]
    %v81 = vld [vmem:[%s1 + $0x8] sm:$0xf]
    %v82 = vld [vmem:[%s1 + $0xc] sm:$0xf]
    %v83 = vld [vmem:[%s1 + $0x10] sm:$0xf]
    %v84 = vld [vmem:[%s1 + $0x14] sm:$0xf]
    %v85 = vld [vmem:[%s1 + $0x18] sm:$0xf]
    %v86 = vld [vmem:[%s1 + $0x1c] sm:$0xf]
    %v87 = vld [vmem:[%s1 + $0x20] sm:$0xf]
    %v88 = vld [vmem:[%s1 + $0x24] sm:$0xf]
    %v89 = vld [vmem:[%s1 + $0x28] sm:$0xf]
    %v90 = vld [vmem:[%s1 + $0x2c] sm:$0xf]
    %v91 = vld [vmem:[%s1 + $0x30] sm:$0xf]
    %v92 = vld [vmem:[%s1 + $0x34] sm:$0xf]
    %v93 = vld [vmem:[%s1 + $0x38] sm:$0xf]
    %v94 = vld [vmem:[%s1 + $0x3c] sm:$0xf]
    %v95 = vld [vmem:[%s1 + $0x40] sm:$0xf]
    %v96 = vld [vmem:[%s1 + $0x44] sm:$0xf]
    %v97 = vld [vmem:[%s1 + $0x48] sm:$0xf]
    %v98 = vld [vmem:[%s1 + $0x4c] sm:$0xf]
    %v99 = vld [vmem:[%s1 + $0x50] sm:$0xf]
    %v100 = vld [vmem:[%s1 + $0x54] sm:$0xf]
    %v101 = vld [vmem:[%s1 + $0x58] sm:$0xf]
    %v102 = vld [vmem:[%s1 + $0x5c] sm:$0xf]
    %v103 = vld [vmem:[%s1 + $0x60] sm:$0xf]
    %v104 = vld [vmem:[%s1 + $0x64] sm:$0xf]
    %v105 = vld [vmem:[%s1 + $0x68] sm:$0xf]
    %v106 = vld [vmem:[%s1 + $0x6c] sm:$0xf]
    %v107 = vld [vmem:[%s1 + $0x70] sm:$0xf]
    %v108 = vld [vmem:[%s1 + $0x74] sm:$0xf]
    %v109 = vld [vmem:[%s1 + $0x78] sm:$0xf]
    %v110 = vld [vmem:[%s1 + $0x7c] sm:$0xf]
    %v111 = vld [vmem:[#allocation2] sm:$0xff]
    %v112 = vld [vmem:[#allocation2 + $0x8] sm:$0xff]
    %v113 = vld [vmem:[#allocation2 + $0x10] sm:$0xff]
    %v114 = vld [vmem:[#allocation2 + $0x18] sm:$0xff]
    %v147 = vunpack.c.l.b16 %v79
    %v148 = vunpack.c.l.b16 %v80
    %v149 = vunpack.c.l.b16 %v81
    %v150 = vunpack.c.l.b16 %v82
    %v151 = vunpack.c.l.b16 %v83
    %v152 = vunpack.c.l.b16 %v84
    %v153 = vunpack.c.l.b16 %v85
    %v154 = vunpack.c.l.b16 %v86
    %v155 = vunpack.c.l.b16 %v87
    %v156 = vunpack.c.l.b16 %v88
    %v157 = vunpack.c.l.b16 %v89
    %v158 = vunpack.c.l.b16 %v90
    %v159 = vunpack.c.l.b16 %v91
    %v160 = vunpack.c.l.b16 %v92
    %v161 = vunpack.c.l.b16 %v93
    %v162 = vunpack.c.l.b16 %v94
    %v163 = vunpack.c.l.b16 %v95
    %v164 = vunpack.c.l.b16 %v96
    %v165 = vunpack.c.l.b16 %v97
    %v166 = vunpack.c.l.b16 %v98
    %v167 = vunpack.c.l.b16 %v99
    %v168 = vunpack.c.l.b16 %v100
    %v169 = vunpack.c.l.b16 %v101
    %v170 = vunpack.c.l.b16 %v102
    %v171 = vunpack.c.l.b16 %v103
    %v172 = vunpack.c.l.b16 %v104
    %v173 = vunpack.c.l.b16 %v105
    %v174 = vunpack.c.l.b16 %v106
    %v175 = vunpack.c.l.b16 %v107
    %v176 = vunpack.c.l.b16 %v108
    %v177 = vunpack.c.l.b16 %v109
    %v178 = vunpack.c.l.b16 %v110
    %v179 = vpack.c.b16 %v148, %v147
    %v180 = vpack.c.b16 %v150, %v149
    %v181 = vpack.c.b16 %v152, %v151
    %v182 = vpack.c.b16 %v154, %v153
    %v183 = vpack.c.b16 %v156, %v155
    %v184 = vpack.c.b16 %v158, %v157
    %v185 = vpack.c.b16 %v160, %v159
    %v186 = vpack.c.b16 %v162, %v161
    %v187 = vpack.c.b16 %v164, %v163
    %v188 = vpack.c.b16 %v166, %v165
    %v189 = vpack.c.b16 %v168, %v167
    %v190 = vpack.c.b16 %v170, %v169
    %v191 = vpack.c.b16 %v172, %v171
    %v192 = vpack.c.b16 %v174, %v173
    %v193 = vpack.c.b16 %v176, %v175
    %v194 = vpack.c.b16 %v178, %v177
    %v196 = vsel %vm32, %v78, 0
    %v199 = vsel %vm32, %v179, 0
    %v202 = vsel %vm32, %v180, 0
    %v205 = vsel %vm32, %v181, 0
    %v208 = vsel %vm32, %v182, 0
    %v211 = vsel %vm32, %v183, 0
    %v214 = vsel %vm32, %v184, 0
    %v217 = vsel %vm32, %v185, 0
    %v220 = vsel %vm32, %v186, 0
    %v223 = vsel %vm32, %v187, 0
    %v226 = vsel %vm32, %v188, 0
    %v229 = vsel %vm32, %v189, 0
    %v232 = vsel %vm32, %v190, 0
    %v235 = vsel %vm32, %v191, 0
    %v238 = vsel %vm32, %v192, 0
    %v241 = vsel %vm32, %v193, 0
    %v244 = vsel %vm32, %v194, 0
    %246 = vmatprep.subr.bf16.mxu0 0
    %247 = vmatpush1.bf16.xpose.msra.mxu0 %v199
    %248 = vmatprep.subr.bf16.mxu0 0
    %249 = vmatpush1.bf16.xpose.msra.mxu0 %v202
    %250 = vmatprep.subr.bf16.mxu0 0
    %251 = vmatpush1.bf16.xpose.msra.mxu0 %v205
    %252 = vmatprep.subr.bf16.mxu0 0
    %253 = vmatpush1.bf16.xpose.msra.mxu0 %v208
    %254 = vmatprep.subr.bf16.mxu0 0
    %255 = vmatpush1.bf16.xpose.msra.mxu0 %v211
    %256 = vmatprep.subr.bf16.mxu0 0
    %257 = vmatpush1.bf16.xpose.msra.mxu0 %v214
    %258 = vmatprep.subr.bf16.mxu0 0
    %259 = vmatpush1.bf16.xpose.msra.mxu0 %v217
    %260 = vmatprep.subr.bf16.mxu0 0
    %261 = vmatpush1.bf16.xpose.msra.mxu0 %v220
    %262 = vmatprep.subr.bf16.mxu0 0
    %263 = vmatpush1.bf16.xpose.msra.mxu0 %v223
    %264 = vmatprep.subr.bf16.mxu0 0
    %265 = vmatpush1.bf16.xpose.msra.mxu0 %v226
    %266 = vmatprep.subr.bf16.mxu0 0
    %267 = vmatpush1.bf16.xpose.msra.mxu0 %v229
    %268 = vmatprep.subr.bf16.mxu0 0
    %269 = vmatpush1.bf16.xpose.msra.mxu0 %v232
    %270 = vmatprep.subr.bf16.mxu0 0
    %271 = vmatpush1.bf16.xpose.msra.mxu0 %v235
    %272 = vmatprep.subr.bf16.mxu0 0
    %273 = vmatpush1.bf16.xpose.msra.mxu0 %v238
    %274 = vmatprep.subr.bf16.mxu0 0
    %275 = vmatpush1.bf16.xpose.msra.mxu0 %v241
    %276 = vmatprep.subr.bf16.mxu0 0
    %277 = vmatpush1.bf16.xpose.msra.mxu0 %v244
    %278 = vmatprep.mubr.bf16.mxu0 0
    %279 = vmatmul.mubr.bf16.gmra.mrb[0].mxu0 %v196
    %v280 = vpop.f32.mrb[0].mxu0
    %v281 = vadd.f32 0.0, %v280
    %v282 = vpop.f32.mrb[0].mxu0
    %v283 = vadd.f32 0.0, %v282
    %v284 = vpop.f32.mrb[0].mxu0
    %v285 = vadd.f32 0.0, %v284
    %v286 = vpop.f32.mrb[0].mxu0
    %v287 = vadd.f32 0.0, %v286
    %288 = vdwg.mxu0
    %v289 = vadd.f32 %v111, %v281
    %v290 = vadd.f32 %v112, %v283
    %v291 = vadd.f32 %v113, %v285
    %v292 = vadd.f32 %v114, %v287
    %293 = vst [vmem:[#allocation2] sm:$0xff] %v289
    %294 = vst [vmem:[#allocation2 + $0x8] sm:$0xff] %v290
    %295 = vst [vmem:[#allocation2 + $0x10] sm:$0xff] %v291
    %296 = vst [vmem:[#allocation2 + $0x18] sm:$0xff] %v292
    // Predicated region
    $region26: #{gpt2_forward.21} parent=1 // pred_check
      %p297 = pneg %p22
    $region27: #{gpt2_forward.21} parent=1 // pred_check_branch
      %299 = sbr.rel (%p297) target = $region29
    $region28: #{gpt2_forward.21} parent=1 // pred_region
      %v300 = vld [vmem:[#allocation2] sm:$0xff]
      %v301 = vld [vmem:[#allocation2 + $0x8] sm:$0xff]
      %v302 = vld [vmem:[#allocation2 + $0x10] sm:$0xff]
      %v303 = vld [vmem:[#allocation2 + $0x18] sm:$0xff]
      %v304 = vld [vmem:[%s2] sm:$0x3]
      %v306 = vlaneseq
      %v307 = vshrl.u32 %v306, 7
      %v308 = vsub.s32 0, %v307
      %v309 = vrot.slane %v304, %v308
      %v310 = vlaneseq
      %v311 = vshrl.u32 %v310, 7
      %v312 = vsub.s32 1, %v311
      %v313 = vrot.slane %v304, %v312
      %v316 = vadd.f32 %v300, %v309
      %v317 = vadd.f32 %v301, %v313
      %v318 = vadd.f32 %v302, %v309
      %v319 = vadd.f32 %v303, %v313
      %320 = vst [vmem:[#allocation3] sm:$0xff] %v316
      %321 = vst [vmem:[#allocation3 + $0x8] sm:$0xff] %v317
      %322 = vst [vmem:[#allocation3 + $0x10] sm:$0xff] %v318
      %323 = vst [vmem:[#allocation3 + $0x18] sm:$0xff] %v319
    $region29: #{gpt2_forward.21} parent=1 // pred_fallthru
      _
    // Predicated region
    $region30: #{gpt2_forward.21} parent=1 // pred_check
      _
    $region31: #{gpt2_forward.21} parent=1 // pred_check_branch
      %325 = sbr.rel (0) target = $region33
    $region32: #{gpt2_forward.21} parent=1 // pred_region
      %s327 = ssub.s32 512, 512
      %328 = vsyncadd [#allocation4], %s327
      %s329 = sshll.u32 [#allocation3], 4
      %s330 = int_to_ptr.vmem [resolvable:$true] %s329
      %335 = dma.vmem_to_hbm [thread:$0]  %s330, 512, %s5, [#allocation4], 256, 256, 16
    $region33: #{gpt2_forward.21} parent=1 // pred_fallthru
      _
    // Predicated region
    $region34: #{gpt2_forward.21} parent=1 // pred_check
      _
    $region35: #{gpt2_forward.21} parent=1 // pred_check_branch
      %337 = sbr.rel (0) target = $region37
    $region36: #{gpt2_forward.21} parent=1 // pred_region
      %338 = dma.done [#allocation4], 512
    $region37: #{gpt2_forward.21} parent=1 // pred_fallthru
      _
    %339 = vsyncpa [#allocation4], 1

</llo_original>
